<compile_context>
chip_gen: v6e
topology: v6e:2x2x1
jax: 0.10.0
libtpu: 0.0.40
codegen_flags: <defaults>
</compile_context>

<pallas_src>
import functools

import jax
import jax.numpy as jnp
from jax import lax
from jax.experimental import pallas as pl
from jax.experimental.pallas import tpu as pltpu


LANES = 128  # lane-dense padded width for the head output and the label K dim


# -----------------------------------------------------------------------------
# Pallas kernel
# -----------------------------------------------------------------------------
def _encdec_kernel(S, T, B, H,
                   embeds_ref, labels_ref,
                   wih_e_ref, whh_e_ref, b_e_ref,
                   wih_d_ref, whh_d_ref, b_d_ref,
                   w_lin_ref, b_lin_ref,
                   scores_ref,
                   hs_ref):
    """Single-program kernel.

    embeds_ref : [S*B, E]   time-major flattened encoder inputs (f32)
    labels_ref : [T*B, Lp]  time-major flattened teacher labels, lane-padded (f32)
    wih_e_ref  : [E, 4H]    encoder input->gates (f32, pre-transposed)
    whh_e_ref  : [H, 4H]    encoder hidden->gates (bf16)
    wih_d_ref  : [Lp, 4H]   decoder input->gates (f32, zero-padded rows)
    whh_d_ref  : [H, 4H]    decoder hidden->gates (bf16)
    b_*        : [1, 4H]    b_ih + b_hh (f32)
    w_lin_ref  : [H, P]     Linear head, output lanes padded to P=128 (f32)
    b_lin_ref  : [1, P]
    scores_ref : [T*B, P]   lane-/sublane-dense output (one unmasked store)
    hs_ref     : [T*B, H]   VMEM scratch stashing the per-outer-step final h
    """
    b_d = b_d_ref[...]
    whh_e = whh_e_ref[...]                     # bf16: single-pass MXU operand
    whh_d = whh_d_ref[...]                     # bf16

    def cell(gates, c):
        # PyTorch LSTM cell; gates packed as [i | f | g | o] along last axis.
        # Transcendentals on the full 4H-wide vreg (EUP), slice afterwards.
        sig = jax.nn.sigmoid(gates)
        th = jnp.tanh(gates)
        i_g = sig[:, 0 * H:1 * H]
        f_g = sig[:, 1 * H:2 * H]
        g_g = th[:, 2 * H:3 * H]
        o_g = sig[:, 3 * H:4 * H]
        c_new = f_g * c + i_g * g_g
        h_new = o_g * jnp.tanh(c_new)
        return h_new, c_new

    def hmm(h, whh):
        # Recurrence matmul on the serial chain: bf16 operands, f32 accumulate.
        return jnp.dot(h.astype(jnp.bfloat16), whh,
                       preferred_element_type=jnp.float32)

    # ---- Hoisted input projections: register-resident values (no scratch) ---
    xproj = (jnp.dot(embeds_ref[...], wih_e_ref[...],
                     preferred_element_type=jnp.float32) + b_e_ref[...])
    lproj = (jnp.dot(labels_ref[...], wih_d_ref[...],
                     preferred_element_type=jnp.float32) + b_d)

    h = jnp.zeros((B, H), jnp.float32)
    c = jnp.zeros((B, H), jnp.float32)

    # ------------- Encoder LSTM over the S instruction tokens ---------------
    # Statically unrolled: only h @ Whh remains on the serial critical path.
    for t in range(S):
        gates = xproj[t * B:(t + 1) * B, :] + hmm(h, whh_e)
        h, c = cell(gates, c)

    # -------- Decoder: teacher-forced re-rollouts, hidden state carried ------
    # TODO(synk): if max_t grows, replace the nested static unroll with a
    # lax.fori_loop over the flattened step sequence to bound vreg live ranges
    # (Python-level unrolling does not), before the regime flips to spill-bound.
    for i in range(T):
        if i == 0:
            # torch.zeros input at the first decoding step: x @ Wih == 0 (skip
            # the matmul) but the bias still applies.
            gates = hmm(h, whh_d) + b_d
            h, c = cell(gates, c)
        else:
            # labels[:, :i, :] — i teacher-forcing steps from the carried (h, c)
            for t in range(i):
                gates = lproj[t * B:(t + 1) * B, :] + hmm(h, whh_d)
                h, c = cell(gates, c)
        # lstm_out[:, -1, :] == last hidden state; stash for the batched head.
        hs_ref[i * B:(i + 1) * B, :] = h

    # ---- Batched Linear head: ONE matmul + one unmasked (8,128) store -------
    scores_ref[...] = (jnp.dot(hs_ref[...], w_lin_ref[...],
                               preferred_element_type=jnp.float32)
                       + b_lin_ref[...])


# -----------------------------------------------------------------------------
# Wrapper (glue: embedding gather, transposes, padding, dtype casts, slicing)
# -----------------------------------------------------------------------------
def encoder_decoder_forward(instructions, labels, params, *, max_t, hidden_dim,
                            actionset_size, objectset_size):
    H = hidden_dim
    B, S = instructions.shape
    T = max_t
    n_out = actionset_size + objectset_size
    P = LANES                                   # lane-dense padded output width
    Lp = LANES                                  # lane-dense padded label width
    assert n_out <= P

    emb_table = params["embedding"]                               # [V, E]
    embeds = jnp.take(emb_table, instructions, axis=0)            # [B, S, E]
    E = embeds.shape[-1]
    # time-major, flattened to [S*B, E] so the hoisted projection is ONE matmul
    embeds_flat = (jnp.transpose(embeds, (1, 0, 2))
                   .reshape(S * B, E).astype(jnp.float32))
    labels_tm = (jnp.transpose(labels, (1, 0, 2))
                 .reshape(T * B, n_out).astype(jnp.float32))      # [T*B, L]
    # Lane-pad labels (and Wih_d rows) to K=128 -> unmasked MXU K operand.
    labels_flat = jnp.pad(labels_tm, ((0, 0), (0, Lp - n_out)))   # [T*B, Lp]
    wih_d_p = jnp.pad(params["wih_d"], ((0, Lp - n_out), (0, 0))) # [Lp, 4H]

    # Pad the Linear head to 128 output lanes (zeros) -> unmasked stores.
    w_lin_p = jnp.pad(params["w_lin"], ((0, 0), (0, P - n_out)))  # [H, P]
    b_lin_p = jnp.pad(params["b_lin"], ((0, 0), (0, P - n_out)))  # [1, P]

    # Recurrence weights as bf16 (cast once, host side) -> single-pass pushes.
    whh_e_bf = params["whh_e"].astype(jnp.bfloat16)
    whh_d_bf = params["whh_d"].astype(jnp.bfloat16)

    args = (embeds_flat, labels_flat,
            params["wih_e"], whh_e_bf, params["b_e"],
            wih_d_p, whh_d_bf, params["b_d"],
            w_lin_p, b_lin_p)

    def full_spec(x):
        nd = x.ndim
        return pl.BlockSpec(x.shape, lambda i, nd=nd: (0,) * nd)

    kernel = functools.partial(_encdec_kernel, S, T, B, H)
    scores = pl.pallas_call(
        kernel,
        out_shape=jax.ShapeDtypeStruct((T * B, P), jnp.float32),
        grid=(1,),
        in_specs=[full_spec(a) for a in args],
        out_specs=pl.BlockSpec((T * B, P), lambda i: (0, 0)),
        scratch_shapes=[pltpu.VMEM((T * B, H), jnp.float32)],
        compiler_params=pltpu.CompilerParams(
            dimension_semantics=("arbitrary",)),
    )(*args)

    scores = scores.reshape(T, B, P)
    scores = jnp.transpose(scores, (1, 0, 2))[:, :, :n_out]       # [B, T, A+O]
    # reproduce the module's (quirky) +1 split exactly
    action_preds = scores[:, :, :actionset_size + 1]
    object_preds = scores[:, :, actionset_size + 1:]
    return action_preds, object_preds


# -----------------------------------------------------------------------------
# Deterministic parameter init (shapes from the module's __init__)
# -----------------------------------------------------------------------------
def init_params(key, *, vocab_size, embedding_dim, hidden_dim,
                actionset_size, objectset_size):
    H = hidden_dim
    L = actionset_size + objectset_size
    ks = jax.random.split(key, 12)

    def rnd(k, shape):
        return (0.1 * jax.random.normal(k, shape)).astype(jnp.float32)

    # Encoder LSTM (PyTorch: weight_ih [4H,E], weight_hh [4H,H], b_ih+b_hh [4H])
    wih_e = rnd(ks[0], (4 * H, embedding_dim)).T                  # -> [E, 4H]
    whh_e = rnd(ks[1], (4 * H, H)).T                              # -> [H, 4H]
    b_e = (rnd(ks[2], (4 * H,)) + rnd(ks[3], (4 * H,))).reshape(1, 4 * H)
    # Decoder LSTM (input_dim = actionset_size + objectset_size)
    wih_d = rnd(ks[4], (4 * H, L)).T                              # -> [L, 4H]
    whh_d = rnd(ks[5], (4 * H, H)).T                              # -> [H, 4H]
    b_d = (rnd(ks[6], (4 * H,)) + rnd(ks[7], (4 * H,))).reshape(1, 4 * H)
    # hidden2action_object Linear: weight [A+O, H], bias [A+O]
    w_lin = rnd(ks[8], (L, H)).T                                  # -> [H, A+O]
    b_lin = rnd(ks[9], (L,)).reshape(1, L)
    # Embedding table [V, E]
    embedding = rnd(ks[10], (vocab_size, embedding_dim))

    return dict(embedding=embedding,
                wih_e=wih_e, whh_e=whh_e, b_e=b_e,
                wih_d=wih_d, whh_d=whh_d, b_d=b_d,
                w_lin=w_lin, b_lin=b_lin)


# -----------------------------------------------------------------------------
# Pure-JAX reference (mirrors the PyTorch forward).  The h @ Whh operands are
# cast to bf16 to match the kernel's MXU operand precision (per review); all
# structure (teacher-forced re-rollouts, carried hidden state) is identical.
# -----------------------------------------------------------------------------
def reference_forward(instructions, labels, params, *, max_t, hidden_dim,
                      actionset_size, objectset_size):
    H = hidden_dim

    def lstm_run(xs, h, c, wih, whh, b):
        whh_bf = whh.astype(jnp.bfloat16)

        def step(carry, x_t):
            h, c = carry
            gates = (x_t @ wih
                     + jnp.dot(h.astype(jnp.bfloat16), whh_bf,
                               preferred_element_type=jnp.float32)
                     + b)
            i_g = jax.nn.sigmoid(gates[:, 0 * H:1 * H])
            f_g = jax.nn.sigmoid(gates[:, 1 * H:2 * H])
            g_g = jnp.tanh(gates[:, 2 * H:3 * H])
            o_g = jax.nn.sigmoid(gates[:, 3 * H:4 * H])
            c_new = f_g * c + i_g * g_g
            h_new = o_g * jnp.tanh(c_new)
            return (h_new, c_new), h_new

        (h, c), _ = lax.scan(step, (h, c), jnp.transpose(xs, (1, 0, 2)))
        return h, c

    B = instructions.shape[0]
    L = actionset_size + objectset_size
    embeds = jnp.take(params["embedding"], instructions, axis=0).astype(jnp.float32)
    h = jnp.zeros((B, H), jnp.float32)
    c = jnp.zeros((B, H), jnp.float32)
    h, c = lstm_run(embeds, h, c, params["wih_e"], params["whh_e"], params["b_e"])

    actions, objects = [], []
    for i in range(max_t):
        x = (jnp.zeros((B, 1, L), jnp.float32) if i == 0
             else labels[:, :i, :].astype(jnp.float32))
        h, c = lstm_run(x, h, c, params["wih_d"], params["whh_d"], params["b_d"])
        a_o = h @ params["w_lin"] + params["b_lin"]
        actions.append(a_o[:, :actionset_size + 1])
        objects.append(a_o[:, actionset_size + 1:])
    return jnp.stack(actions, 1), jnp.stack(objects, 1)


# -----------------------------------------------------------------------------
if __name__ == "__main__":
    B, S = 2, 8                 # batch, instruction sequence length
    EMB, HID, VOCAB = 32, 32, 16
    ASET, OSET = 5, 6           # actionset_size, objectset_size
    MAX_T = 4

    key = jax.random.PRNGKey(0)
    kp, ki, kl = jax.random.split(key, 3)
    params = init_params(kp, vocab_size=VOCAB, embedding_dim=EMB,
                         hidden_dim=HID, actionset_size=ASET,
                         objectset_size=OSET)
    instructions = jax.random.randint(ki, (B, S), 0, VOCAB, dtype=jnp.int32)
    labels = jax.random.normal(kl, (B, MAX_T, ASET + OSET), dtype=jnp.float32)

    action_preds, object_preds = encoder_decoder_forward(
        instructions, labels, params, max_t=MAX_T, hidden_dim=HID,
        actionset_size=ASET, objectset_size=OSET)
    jax.block_until_ready((action_preds, object_preds))

    ref_a, ref_o = reference_forward(
        instructions, labels, params, max_t=MAX_T, hidden_dim=HID,
        actionset_size=ASET, objectset_size=OSET)

    assert action_preds.shape == (B, MAX_T, ASET + 1), action_preds.shape
    assert object_preds.shape == (B, MAX_T, OSET - 1), object_preds.shape
    # Tolerance accounts for bf16 MXU operands on the recurrence (review item).
    assert jnp.allclose(action_preds, ref_a, atol=1e-2, rtol=1e-2)
    assert jnp.allclose(object_preds, ref_o, atol=1e-2, rtol=1e-2)
    print("KERNEL_OK")
</pallas_src>

<mosaic_0001>
module attributes {stable_mosaic.version = 11 : i64} {
  func.func @_encdec_kernel(%arg0: i32, %arg1: memref<16x32xf32, #tpu.memory_space<vmem>>, %arg2: memref<8x128xf32, #tpu.memory_space<vmem>>, %arg3: memref<32x128xf32, #tpu.memory_space<vmem>>, %arg4: memref<32x128xbf16, #tpu.memory_space<vmem>>, %arg5: memref<1x128xf32, #tpu.memory_space<vmem>>, %arg6: memref<128x128xf32, #tpu.memory_space<vmem>>, %arg7: memref<32x128xbf16, #tpu.memory_space<vmem>>, %arg8: memref<1x128xf32, #tpu.memory_space<vmem>>, %arg9: memref<32x128xf32, #tpu.memory_space<vmem>>, %arg10: memref<1x128xf32, #tpu.memory_space<vmem>>, %arg11: memref<8x128xf32, #tpu.memory_space<vmem>>, %arg12: memref<8x32xf32, #tpu.memory_space<vmem>>) attributes {dimension_semantics = [#tpu.dimension_semantics<arbitrary>], iteration_bounds = array<i64: 1>, scalar_prefetch = 0 : i64, scratch_operands = 1 : i64, tpu.core_type = #tpu.core_type<tc>, window_params = [{pipeline_mode = #tpu.pipeline_mode<synchronous>, transform_indices = @transform_0, window_bounds = array<i64: 16, 32>}, {pipeline_mode = #tpu.pipeline_mode<synchronous>, transform_indices = @transform_1, window_bounds = array<i64: 8, 128>}, {pipeline_mode = #tpu.pipeline_mode<synchronous>, transform_indices = @transform_2, window_bounds = array<i64: 32, 128>}, {pipeline_mode = #tpu.pipeline_mode<synchronous>, transform_indices = @transform_3, window_bounds = array<i64: 32, 128>}, {pipeline_mode = #tpu.pipeline_mode<synchronous>, transform_indices = @transform_4, window_bounds = array<i64: 1, 128>}, {pipeline_mode = #tpu.pipeline_mode<synchronous>, transform_indices = @transform_5, window_bounds = array<i64: 128, 128>}, {pipeline_mode = #tpu.pipeline_mode<synchronous>, transform_indices = @transform_6, window_bounds = array<i64: 32, 128>}, {pipeline_mode = #tpu.pipeline_mode<synchronous>, transform_indices = @transform_7, window_bounds = array<i64: 1, 128>}, {pipeline_mode = #tpu.pipeline_mode<synchronous>, transform_indices = @transform_8, window_bounds = array<i64: 32, 128>}, {pipeline_mode = #tpu.pipeline_mode<synchronous>, transform_indices = @transform_9, window_bounds = array<i64: 1, 128>}, {pipeline_mode = #tpu.pipeline_mode<synchronous>, transform_indices = @transform_10, window_bounds = array<i64: 8, 128>}]} {
    %c0 = arith.constant 0 : index
    %c0_0 = arith.constant 0 : index
    %0 = vector.load %arg8[%c0, %c0_0] : memref<1x128xf32, #tpu.memory_space<vmem>>, vector<1x128xf32>
    %c0_1 = arith.constant 0 : index
    %c0_2 = arith.constant 0 : index
    %1 = vector.load %arg4[%c0_1, %c0_2] : memref<32x128xbf16, #tpu.memory_space<vmem>>, vector<32x128xbf16>
    %c0_3 = arith.constant 0 : index
    %c0_4 = arith.constant 0 : index
    %2 = vector.load %arg7[%c0_3, %c0_4] : memref<32x128xbf16, #tpu.memory_space<vmem>>, vector<32x128xbf16>
    %c0_5 = arith.constant 0 : index
    %c0_6 = arith.constant 0 : index
    %3 = vector.load %arg1[%c0_5, %c0_6] : memref<16x32xf32, #tpu.memory_space<vmem>>, vector<16x32xf32>
    %c0_7 = arith.constant 0 : index
    %c0_8 = arith.constant 0 : index
    %4 = vector.load %arg3[%c0_7, %c0_8] : memref<32x128xf32, #tpu.memory_space<vmem>>, vector<32x128xf32>
    %cst = arith.constant dense<0.000000e+00> : vector<16x128xf32>
    %5 = tpu.matmul %3, %4, %cst {dimension_numbers = #tpu.dot_dimension_numbers<[1], [0], [0], [1], [0, 0, 1, 1], [], []>} : vector<16x32xf32>, vector<32x128xf32>, vector<16x128xf32> -> vector<16x128xf32>
    %c0_9 = arith.constant 0 : index
    %c0_10 = arith.constant 0 : index
    %6 = vector.load %arg5[%c0_9, %c0_10] : memref<1x128xf32, #tpu.memory_space<vmem>>, vector<1x128xf32>
    %7 = vector.broadcast %6 : vector<1x128xf32> to vector<16x128xf32>
    %8 = arith.addf %5, %7 : vector<16x128xf32>
    %c0_11 = arith.constant 0 : index
    %c0_12 = arith.constant 0 : index
    %9 = vector.load %arg2[%c0_11, %c0_12] : memref<8x128xf32, #tpu.memory_space<vmem>>, vector<8x128xf32>
    %c0_13 = arith.constant 0 : index
    %c0_14 = arith.constant 0 : index
    %10 = vector.load %arg6[%c0_13, %c0_14] : memref<128x128xf32, #tpu.memory_space<vmem>>, vector<128x128xf32>
    %cst_15 = arith.constant dense<0.000000e+00> : vector<8x128xf32>
    %11 = tpu.matmul %9, %10, %cst_15 {dimension_numbers = #tpu.dot_dimension_numbers<[1], [0], [0], [1], [0, 0, 1, 1], [], []>} : vector<8x128xf32>, vector<128x128xf32>, vector<8x128xf32> -> vector<8x128xf32>
    %12 = vector.broadcast %0 : vector<1x128xf32> to vector<8x128xf32>
    %13 = arith.addf %11, %12 : vector<8x128xf32>
    %cst_16 = arith.constant 0.000000e+00 : f32
    %14 = vector.broadcast %cst_16 : f32 to vector<2x32xf32>
    %cst_17 = arith.constant 0.000000e+00 : f32
    %15 = vector.broadcast %cst_17 : f32 to vector<2x32xf32>
    %16 = vector.extract_strided_slice %8 {offsets = [0, 0], sizes = [2, 128], strides = [1, 1]} : vector<16x128xf32> to vector<2x128xf32>
    %17 = arith.truncf %14 : vector<2x32xf32> to vector<2x32xbf16>
    %cst_18 = arith.constant dense<0.000000e+00> : vector<2x128xf32>
    %18 = tpu.matmul %17, %1, %cst_18 {dimension_numbers = #tpu.dot_dimension_numbers<[1], [0], [0], [1], [0, 0, 1, 1], [], []>} : vector<2x32xbf16>, vector<32x128xbf16>, vector<2x128xf32> -> vector<2x128xf32>
    %19 = arith.addf %16, %18 : vector<2x128xf32>
    %20 = arith.negf %19 : vector<2x128xf32>
    %21 = math.exp %20 : vector<2x128xf32>
    %cst_19 = arith.constant 1.000000e+00 : f32
    %22 = vector.broadcast %cst_19 : f32 to vector<2x128xf32>
    %23 = arith.addf %22, %21 : vector<2x128xf32>
    %24 = arith.divf %22, %23 : vector<2x128xf32>
    %25 = math.tanh %19 : vector<2x128xf32>
    %26 = vector.extract_strided_slice %24 {offsets = [0, 0], sizes = [2, 32], strides = [1, 1]} : vector<2x128xf32> to vector<2x32xf32>
    %27 = vector.extract_strided_slice %24 {offsets = [0, 32], sizes = [2, 32], strides = [1, 1]} : vector<2x128xf32> to vector<2x32xf32>
    %28 = vector.extract_strided_slice %25 {offsets = [0, 64], sizes = [2, 32], strides = [1, 1]} : vector<2x128xf32> to vector<2x32xf32>
    %29 = vector.extract_strided_slice %24 {offsets = [0, 96], sizes = [2, 32], strides = [1, 1]} : vector<2x128xf32> to vector<2x32xf32>
    %30 = arith.mulf %27, %15 : vector<2x32xf32>
    %31 = arith.mulf %26, %28 : vector<2x32xf32>
    %32 = arith.addf %30, %31 : vector<2x32xf32>
    %33 = math.tanh %32 : vector<2x32xf32>
    %34 = arith.mulf %29, %33 : vector<2x32xf32>
    %35 = vector.extract_strided_slice %8 {offsets = [2, 0], sizes = [2, 128], strides = [1, 1]} : vector<16x128xf32> to vector<2x128xf32>
    %36 = arith.truncf %34 : vector<2x32xf32> to vector<2x32xbf16>
    %cst_20 = arith.constant dense<0.000000e+00> : vector<2x128xf32>
    %37 = tpu.matmul %36, %1, %cst_20 {dimension_numbers = #tpu.dot_dimension_numbers<[1], [0], [0], [1], [0, 0, 1, 1], [], []>} : vector<2x32xbf16>, vector<32x128xbf16>, vector<2x128xf32> -> vector<2x128xf32>
    %38 = arith.addf %35, %37 : vector<2x128xf32>
    %39 = arith.negf %38 : vector<2x128xf32>
    %40 = math.exp %39 : vector<2x128xf32>
    %cst_21 = arith.constant 1.000000e+00 : f32
    %41 = vector.broadcast %cst_21 : f32 to vector<2x128xf32>
    %42 = arith.addf %41, %40 : vector<2x128xf32>
    %43 = arith.divf %41, %42 : vector<2x128xf32>
    %44 = math.tanh %38 : vector<2x128xf32>
    %45 = vector.extract_strided_slice %43 {offsets = [0, 0], sizes = [2, 32], strides = [1, 1]} : vector<2x128xf32> to vector<2x32xf32>
    %46 = vector.extract_strided_slice %43 {offsets = [0, 32], sizes = [2, 32], strides = [1, 1]} : vector<2x128xf32> to vector<2x32xf32>
    %47 = vector.extract_strided_slice %44 {offsets = [0, 64], sizes = [2, 32], strides = [1, 1]} : vector<2x128xf32> to vector<2x32xf32>
    %48 = vector.extract_strided_slice %43 {offsets = [0, 96], sizes = [2, 32], strides = [1, 1]} : vector<2x128xf32> to vector<2x32xf32>
    %49 = arith.mulf %46, %32 : vector<2x32xf32>
    %50 = arith.mulf %45, %47 : vector<2x32xf32>
    %51 = arith.addf %49, %50 : vector<2x32xf32>
    %52 = math.tanh %51 : vector<2x32xf32>
    %53 = arith.mulf %48, %52 : vector<2x32xf32>
    %54 = vector.extract_strided_slice %8 {offsets = [4, 0], sizes = [2, 128], strides = [1, 1]} : vector<16x128xf32> to vector<2x128xf32>
    %55 = arith.truncf %53 : vector<2x32xf32> to vector<2x32xbf16>
    %cst_22 = arith.constant dense<0.000000e+00> : vector<2x128xf32>
    %56 = tpu.matmul %55, %1, %cst_22 {dimension_numbers = #tpu.dot_dimension_numbers<[1], [0], [0], [1], [0, 0, 1, 1], [], []>} : vector<2x32xbf16>, vector<32x128xbf16>, vector<2x128xf32> -> vector<2x128xf32>
    %57 = arith.addf %54, %56 : vector<2x128xf32>
    %58 = arith.negf %57 : vector<2x128xf32>
    %59 = math.exp %58 : vector<2x128xf32>
    %cst_23 = arith.constant 1.000000e+00 : f32
    %60 = vector.broadcast %cst_23 : f32 to vector<2x128xf32>
    %61 = arith.addf %60, %59 : vector<2x128xf32>
    %62 = arith.divf %60, %61 : vector<2x128xf32>
    %63 = math.tanh %57 : vector<2x128xf32>
    %64 = vector.extract_strided_slice %62 {offsets = [0, 0], sizes = [2, 32], strides = [1, 1]} : vector<2x128xf32> to vector<2x32xf32>
    %65 = vector.extract_strided_slice %62 {offsets = [0, 32], sizes = [2, 32], strides = [1, 1]} : vector<2x128xf32> to vector<2x32xf32>
    %66 = vector.extract_strided_slice %63 {offsets = [0, 64], sizes = [2, 32], strides = [1, 1]} : vector<2x128xf32> to vector<2x32xf32>
    %67 = vector.extract_strided_slice %62 {offsets = [0, 96], sizes = [2, 32], strides = [1, 1]} : vector<2x128xf32> to vector<2x32xf32>
    %68 = arith.mulf %65, %51 : vector<2x32xf32>
    %69 = arith.mulf %64, %66 : vector<2x32xf32>
    %70 = arith.addf %68, %69 : vector<2x32xf32>
    %71 = math.tanh %70 : vector<2x32xf32>
    %72 = arith.mulf %67, %71 : vector<2x32xf32>
    %73 = vector.extract_strided_slice %8 {offsets = [6, 0], sizes = [2, 128], strides = [1, 1]} : vector<16x128xf32> to vector<2x128xf32>
    %74 = arith.truncf %72 : vector<2x32xf32> to vector<2x32xbf16>
    %cst_24 = arith.constant dense<0.000000e+00> : vector<2x128xf32>
    %75 = tpu.matmul %74, %1, %cst_24 {dimension_numbers = #tpu.dot_dimension_numbers<[1], [0], [0], [1], [0, 0, 1, 1], [], []>} : vector<2x32xbf16>, vector<32x128xbf16>, vector<2x128xf32> -> vector<2x128xf32>
    %76 = arith.addf %73, %75 : vector<2x128xf32>
    %77 = arith.negf %76 : vector<2x128xf32>
    %78 = math.exp %77 : vector<2x128xf32>
    %cst_25 = arith.constant 1.000000e+00 : f32
    %79 = vector.broadcast %cst_25 : f32 to vector<2x128xf32>
    %80 = arith.addf %79, %78 : vector<2x128xf32>
    %81 = arith.divf %79, %80 : vector<2x128xf32>
    %82 = math.tanh %76 : vector<2x128xf32>
    %83 = vector.extract_strided_slice %81 {offsets = [0, 0], sizes = [2, 32], strides = [1, 1]} : vector<2x128xf32> to vector<2x32xf32>
    %84 = vector.extract_strided_slice %81 {offsets = [0, 32], sizes = [2, 32], strides = [1, 1]} : vector<2x128xf32> to vector<2x32xf32>
    %85 = vector.extract_strided_slice %82 {offsets = [0, 64], sizes = [2, 32], strides = [1, 1]} : vector<2x128xf32> to vector<2x32xf32>
    %86 = vector.extract_strided_slice %81 {offsets = [0, 96], sizes = [2, 32], strides = [1, 1]} : vector<2x128xf32> to vector<2x32xf32>
    %87 = arith.mulf %84, %70 : vector<2x32xf32>
    %88 = arith.mulf %83, %85 : vector<2x32xf32>
    %89 = arith.addf %87, %88 : vector<2x32xf32>
    %90 = math.tanh %89 : vector<2x32xf32>
    %91 = arith.mulf %86, %90 : vector<2x32xf32>
    %92 = vector.extract_strided_slice %8 {offsets = [8, 0], sizes = [2, 128], strides = [1, 1]} : vector<16x128xf32> to vector<2x128xf32>
    %93 = arith.truncf %91 : vector<2x32xf32> to vector<2x32xbf16>
    %cst_26 = arith.constant dense<0.000000e+00> : vector<2x128xf32>
    %94 = tpu.matmul %93, %1, %cst_26 {dimension_numbers = #tpu.dot_dimension_numbers<[1], [0], [0], [1], [0, 0, 1, 1], [], []>} : vector<2x32xbf16>, vector<32x128xbf16>, vector<2x128xf32> -> vector<2x128xf32>
    %95 = arith.addf %92, %94 : vector<2x128xf32>
    %96 = arith.negf %95 : vector<2x128xf32>
    %97 = math.exp %96 : vector<2x128xf32>
    %cst_27 = arith.constant 1.000000e+00 : f32
    %98 = vector.broadcast %cst_27 : f32 to vector<2x128xf32>
    %99 = arith.addf %98, %97 : vector<2x128xf32>
    %100 = arith.divf %98, %99 : vector<2x128xf32>
    %101 = math.tanh %95 : vector<2x128xf32>
    %102 = vector.extract_strided_slice %100 {offsets = [0, 0], sizes = [2, 32], strides = [1, 1]} : vector<2x128xf32> to vector<2x32xf32>
    %103 = vector.extract_strided_slice %100 {offsets = [0, 32], sizes = [2, 32], strides = [1, 1]} : vector<2x128xf32> to vector<2x32xf32>
    %104 = vector.extract_strided_slice %101 {offsets = [0, 64], sizes = [2, 32], strides = [1, 1]} : vector<2x128xf32> to vector<2x32xf32>
    %105 = vector.extract_strided_slice %100 {offsets = [0, 96], sizes = [2, 32], strides = [1, 1]} : vector<2x128xf32> to vector<2x32xf32>
    %106 = arith.mulf %103, %89 : vector<2x32xf32>
    %107 = arith.mulf %102, %104 : vector<2x32xf32>
    %108 = arith.addf %106, %107 : vector<2x32xf32>
    %109 = math.tanh %108 : vector<2x32xf32>
    %110 = arith.mulf %105, %109 : vector<2x32xf32>
    %111 = vector.extract_strided_slice %8 {offsets = [10, 0], sizes = [2, 128], strides = [1, 1]} : vector<16x128xf32> to vector<2x128xf32>
    %112 = arith.truncf %110 : vector<2x32xf32> to vector<2x32xbf16>
    %cst_28 = arith.constant dense<0.000000e+00> : vector<2x128xf32>
    %113 = tpu.matmul %112, %1, %cst_28 {dimension_numbers = #tpu.dot_dimension_numbers<[1], [0], [0], [1], [0, 0, 1, 1], [], []>} : vector<2x32xbf16>, vector<32x128xbf16>, vector<2x128xf32> -> vector<2x128xf32>
    %114 = arith.addf %111, %113 : vector<2x128xf32>
    %115 = arith.negf %114 : vector<2x128xf32>
    %116 = math.exp %115 : vector<2x128xf32>
    %cst_29 = arith.constant 1.000000e+00 : f32
    %117 = vector.broadcast %cst_29 : f32 to vector<2x128xf32>
    %118 = arith.addf %117, %116 : vector<2x128xf32>
    %119 = arith.divf %117, %118 : vector<2x128xf32>
    %120 = math.tanh %114 : vector<2x128xf32>
    %121 = vector.extract_strided_slice %119 {offsets = [0, 0], sizes = [2, 32], strides = [1, 1]} : vector<2x128xf32> to vector<2x32xf32>
    %122 = vector.extract_strided_slice %119 {offsets = [0, 32], sizes = [2, 32], strides = [1, 1]} : vector<2x128xf32> to vector<2x32xf32>
    %123 = vector.extract_strided_slice %120 {offsets = [0, 64], sizes = [2, 32], strides = [1, 1]} : vector<2x128xf32> to vector<2x32xf32>
    %124 = vector.extract_strided_slice %119 {offsets = [0, 96], sizes = [2, 32], strides = [1, 1]} : vector<2x128xf32> to vector<2x32xf32>
    %125 = arith.mulf %122, %108 : vector<2x32xf32>
    %126 = arith.mulf %121, %123 : vector<2x32xf32>
    %127 = arith.addf %125, %126 : vector<2x32xf32>
    %128 = math.tanh %127 : vector<2x32xf32>
    %129 = arith.mulf %124, %128 : vector<2x32xf32>
    %130 = vector.extract_strided_slice %8 {offsets = [12, 0], sizes = [2, 128], strides = [1, 1]} : vector<16x128xf32> to vector<2x128xf32>
    %131 = arith.truncf %129 : vector<2x32xf32> to vector<2x32xbf16>
    %cst_30 = arith.constant dense<0.000000e+00> : vector<2x128xf32>
    %132 = tpu.matmul %131, %1, %cst_30 {dimension_numbers = #tpu.dot_dimension_numbers<[1], [0], [0], [1], [0, 0, 1, 1], [], []>} : vector<2x32xbf16>, vector<32x128xbf16>, vector<2x128xf32> -> vector<2x128xf32>
    %133 = arith.addf %130, %132 : vector<2x128xf32>
    %134 = arith.negf %133 : vector<2x128xf32>
    %135 = math.exp %134 : vector<2x128xf32>
    %cst_31 = arith.constant 1.000000e+00 : f32
    %136 = vector.broadcast %cst_31 : f32 to vector<2x128xf32>
    %137 = arith.addf %136, %135 : vector<2x128xf32>
    %138 = arith.divf %136, %137 : vector<2x128xf32>
    %139 = math.tanh %133 : vector<2x128xf32>
    %140 = vector.extract_strided_slice %138 {offsets = [0, 0], sizes = [2, 32], strides = [1, 1]} : vector<2x128xf32> to vector<2x32xf32>
    %141 = vector.extract_strided_slice %138 {offsets = [0, 32], sizes = [2, 32], strides = [1, 1]} : vector<2x128xf32> to vector<2x32xf32>
    %142 = vector.extract_strided_slice %139 {offsets = [0, 64], sizes = [2, 32], strides = [1, 1]} : vector<2x128xf32> to vector<2x32xf32>
    %143 = vector.extract_strided_slice %138 {offsets = [0, 96], sizes = [2, 32], strides = [1, 1]} : vector<2x128xf32> to vector<2x32xf32>
    %144 = arith.mulf %141, %127 : vector<2x32xf32>
    %145 = arith.mulf %140, %142 : vector<2x32xf32>
    %146 = arith.addf %144, %145 : vector<2x32xf32>
    %147 = math.tanh %146 : vector<2x32xf32>
    %148 = arith.mulf %143, %147 : vector<2x32xf32>
    %149 = vector.extract_strided_slice %8 {offsets = [14, 0], sizes = [2, 128], strides = [1, 1]} : vector<16x128xf32> to vector<2x128xf32>
    %150 = arith.truncf %148 : vector<2x32xf32> to vector<2x32xbf16>
    %cst_32 = arith.constant dense<0.000000e+00> : vector<2x128xf32>
    %151 = tpu.matmul %150, %1, %cst_32 {dimension_numbers = #tpu.dot_dimension_numbers<[1], [0], [0], [1], [0, 0, 1, 1], [], []>} : vector<2x32xbf16>, vector<32x128xbf16>, vector<2x128xf32> -> vector<2x128xf32>
    %152 = arith.addf %149, %151 : vector<2x128xf32>
    %153 = arith.negf %152 : vector<2x128xf32>
    %154 = math.exp %153 : vector<2x128xf32>
    %cst_33 = arith.constant 1.000000e+00 : f32
    %155 = vector.broadcast %cst_33 : f32 to vector<2x128xf32>
    %156 = arith.addf %155, %154 : vector<2x128xf32>
    %157 = arith.divf %155, %156 : vector<2x128xf32>
    %158 = math.tanh %152 : vector<2x128xf32>
    %159 = vector.extract_strided_slice %157 {offsets = [0, 0], sizes = [2, 32], strides = [1, 1]} : vector<2x128xf32> to vector<2x32xf32>
    %160 = vector.extract_strided_slice %157 {offsets = [0, 32], sizes = [2, 32], strides = [1, 1]} : vector<2x128xf32> to vector<2x32xf32>
    %161 = vector.extract_strided_slice %158 {offsets = [0, 64], sizes = [2, 32], strides = [1, 1]} : vector<2x128xf32> to vector<2x32xf32>
    %162 = vector.extract_strided_slice %157 {offsets = [0, 96], sizes = [2, 32], strides = [1, 1]} : vector<2x128xf32> to vector<2x32xf32>
    %163 = arith.mulf %160, %146 : vector<2x32xf32>
    %164 = arith.mulf %159, %161 : vector<2x32xf32>
    %165 = arith.addf %163, %164 : vector<2x32xf32>
    %166 = math.tanh %165 : vector<2x32xf32>
    %167 = arith.mulf %162, %166 : vector<2x32xf32>
    %168 = arith.truncf %167 : vector<2x32xf32> to vector<2x32xbf16>
    %cst_34 = arith.constant dense<0.000000e+00> : vector<2x128xf32>
    %169 = tpu.matmul %168, %2, %cst_34 {dimension_numbers = #tpu.dot_dimension_numbers<[1], [0], [0], [1], [0, 0, 1, 1], [], []>} : vector<2x32xbf16>, vector<32x128xbf16>, vector<2x128xf32> -> vector<2x128xf32>
    %170 = vector.broadcast %0 : vector<1x128xf32> to vector<2x128xf32>
    %171 = arith.addf %169, %170 : vector<2x128xf32>
    %172 = arith.negf %171 : vector<2x128xf32>
    %173 = math.exp %172 : vector<2x128xf32>
    %cst_35 = arith.constant 1.000000e+00 : f32
    %174 = vector.broadcast %cst_35 : f32 to vector<2x128xf32>
    %175 = arith.addf %174, %173 : vector<2x128xf32>
    %176 = arith.divf %174, %175 : vector<2x128xf32>
    %177 = math.tanh %171 : vector<2x128xf32>
    %178 = vector.extract_strided_slice %176 {offsets = [0, 0], sizes = [2, 32], strides = [1, 1]} : vector<2x128xf32> to vector<2x32xf32>
    %179 = vector.extract_strided_slice %176 {offsets = [0, 32], sizes = [2, 32], strides = [1, 1]} : vector<2x128xf32> to vector<2x32xf32>
    %180 = vector.extract_strided_slice %177 {offsets = [0, 64], sizes = [2, 32], strides = [1, 1]} : vector<2x128xf32> to vector<2x32xf32>
    %181 = vector.extract_strided_slice %176 {offsets = [0, 96], sizes = [2, 32], strides = [1, 1]} : vector<2x128xf32> to vector<2x32xf32>
    %182 = arith.mulf %179, %165 : vector<2x32xf32>
    %183 = arith.mulf %178, %180 : vector<2x32xf32>
    %184 = arith.addf %182, %183 : vector<2x32xf32>
    %185 = math.tanh %184 : vector<2x32xf32>
    %186 = arith.mulf %181, %185 : vector<2x32xf32>
    %c0_36 = arith.constant 0 : index
    %c0_37 = arith.constant 0 : index
    %187 = vector.load %arg12[%c0_36, %c0_37] : memref<8x32xf32, #tpu.memory_space<vmem>>, vector<2x32xf32>
    tpu.vector_store %arg12[%c0_36, %c0_37], %186 {strides = array<i32>} : memref<8x32xf32, #tpu.memory_space<vmem>>, vector<2x32xf32>,
    %188 = vector.extract_strided_slice %13 {offsets = [0, 0], sizes = [2, 128], strides = [1, 1]} : vector<8x128xf32> to vector<2x128xf32>
    %189 = arith.truncf %186 : vector<2x32xf32> to vector<2x32xbf16>
    %cst_38 = arith.constant dense<0.000000e+00> : vector<2x128xf32>
    %190 = tpu.matmul %189, %2, %cst_38 {dimension_numbers = #tpu.dot_dimension_numbers<[1], [0], [0], [1], [0, 0, 1, 1], [], []>} : vector<2x32xbf16>, vector<32x128xbf16>, vector<2x128xf32> -> vector<2x128xf32>
    %191 = arith.addf %188, %190 : vector<2x128xf32>
    %192 = arith.negf %191 : vector<2x128xf32>
    %193 = math.exp %192 : vector<2x128xf32>
    %cst_39 = arith.constant 1.000000e+00 : f32
    %194 = vector.broadcast %cst_39 : f32 to vector<2x128xf32>
    %195 = arith.addf %194, %193 : vector<2x128xf32>
    %196 = arith.divf %194, %195 : vector<2x128xf32>
    %197 = math.tanh %191 : vector<2x128xf32>
    %198 = vector.extract_strided_slice %196 {offsets = [0, 0], sizes = [2, 32], strides = [1, 1]} : vector<2x128xf32> to vector<2x32xf32>
    %199 = vector.extract_strided_slice %196 {offsets = [0, 32], sizes = [2, 32], strides = [1, 1]} : vector<2x128xf32> to vector<2x32xf32>
    %200 = vector.extract_strided_slice %197 {offsets = [0, 64], sizes = [2, 32], strides = [1, 1]} : vector<2x128xf32> to vector<2x32xf32>
    %201 = vector.extract_strided_slice %196 {offsets = [0, 96], sizes = [2, 32], strides = [1, 1]} : vector<2x128xf32> to vector<2x32xf32>
    %202 = arith.mulf %199, %184 : vector<2x32xf32>
    %203 = arith.mulf %198, %200 : vector<2x32xf32>
    %204 = arith.addf %202, %203 : vector<2x32xf32>
    %205 = math.tanh %204 : vector<2x32xf32>
    %206 = arith.mulf %201, %205 : vector<2x32xf32>
    %c2 = arith.constant 2 : index
    %c0_40 = arith.constant 0 : index
    %207 = vector.load %arg12[%c2, %c0_40] : memref<8x32xf32, #tpu.memory_space<vmem>>, vector<2x32xf32>
    tpu.vector_store %arg12[%c2, %c0_40], %206 {strides = array<i32>} : memref<8x32xf32, #tpu.memory_space<vmem>>, vector<2x32xf32>,
    %208 = vector.extract_strided_slice %13 {offsets = [0, 0], sizes = [2, 128], strides = [1, 1]} : vector<8x128xf32> to vector<2x128xf32>
    %209 = arith.truncf %206 : vector<2x32xf32> to vector<2x32xbf16>
    %cst_41 = arith.constant dense<0.000000e+00> : vector<2x128xf32>
    %210 = tpu.matmul %209, %2, %cst_41 {dimension_numbers = #tpu.dot_dimension_numbers<[1], [0], [0], [1], [0, 0, 1, 1], [], []>} : vector<2x32xbf16>, vector<32x128xbf16>, vector<2x128xf32> -> vector<2x128xf32>
    %211 = arith.addf %208, %210 : vector<2x128xf32>
    %212 = arith.negf %211 : vector<2x128xf32>
    %213 = math.exp %212 : vector<2x128xf32>
    %cst_42 = arith.constant 1.000000e+00 : f32
    %214 = vector.broadcast %cst_42 : f32 to vector<2x128xf32>
    %215 = arith.addf %214, %213 : vector<2x128xf32>
    %216 = arith.divf %214, %215 : vector<2x128xf32>
    %217 = math.tanh %211 : vector<2x128xf32>
    %218 = vector.extract_strided_slice %216 {offsets = [0, 0], sizes = [2, 32], strides = [1, 1]} : vector<2x128xf32> to vector<2x32xf32>
    %219 = vector.extract_strided_slice %216 {offsets = [0, 32], sizes = [2, 32], strides = [1, 1]} : vector<2x128xf32> to vector<2x32xf32>
    %220 = vector.extract_strided_slice %217 {offsets = [0, 64], sizes = [2, 32], strides = [1, 1]} : vector<2x128xf32> to vector<2x32xf32>
    %221 = vector.extract_strided_slice %216 {offsets = [0, 96], sizes = [2, 32], strides = [1, 1]} : vector<2x128xf32> to vector<2x32xf32>
    %222 = arith.mulf %219, %204 : vector<2x32xf32>
    %223 = arith.mulf %218, %220 : vector<2x32xf32>
    %224 = arith.addf %222, %223 : vector<2x32xf32>
    %225 = math.tanh %224 : vector<2x32xf32>
    %226 = arith.mulf %221, %225 : vector<2x32xf32>
    %227 = vector.extract_strided_slice %13 {offsets = [2, 0], sizes = [2, 128], strides = [1, 1]} : vector<8x128xf32> to vector<2x128xf32>
    %228 = arith.truncf %226 : vector<2x32xf32> to vector<2x32xbf16>
    %cst_43 = arith.constant dense<0.000000e+00> : vector<2x128xf32>
    %229 = tpu.matmul %228, %2, %cst_43 {dimension_numbers = #tpu.dot_dimension_numbers<[1], [0], [0], [1], [0, 0, 1, 1], [], []>} : vector<2x32xbf16>, vector<32x128xbf16>, vector<2x128xf32> -> vector<2x128xf32>
    %230 = arith.addf %227, %229 : vector<2x128xf32>
    %231 = arith.negf %230 : vector<2x128xf32>
    %232 = math.exp %231 : vector<2x128xf32>
    %cst_44 = arith.constant 1.000000e+00 : f32
    %233 = vector.broadcast %cst_44 : f32 to vector<2x128xf32>
    %234 = arith.addf %233, %232 : vector<2x128xf32>
    %235 = arith.divf %233, %234 : vector<2x128xf32>
    %236 = math.tanh %230 : vector<2x128xf32>
    %237 = vector.extract_strided_slice %235 {offsets = [0, 0], sizes = [2, 32], strides = [1, 1]} : vector<2x128xf32> to vector<2x32xf32>
    %238 = vector.extract_strided_slice %235 {offsets = [0, 32], sizes = [2, 32], strides = [1, 1]} : vector<2x128xf32> to vector<2x32xf32>
    %239 = vector.extract_strided_slice %236 {offsets = [0, 64], sizes = [2, 32], strides = [1, 1]} : vector<2x128xf32> to vector<2x32xf32>
    %240 = vector.extract_strided_slice %235 {offsets = [0, 96], sizes = [2, 32], strides = [1, 1]} : vector<2x128xf32> to vector<2x32xf32>
    %241 = arith.mulf %238, %224 : vector<2x32xf32>
    %242 = arith.mulf %237, %239 : vector<2x32xf32>
    %243 = arith.addf %241, %242 : vector<2x32xf32>
    %244 = math.tanh %243 : vector<2x32xf32>
    %245 = arith.mulf %240, %244 : vector<2x32xf32>
    %c4 = arith.constant 4 : index
    %c0_45 = arith.constant 0 : index
    %246 = vector.load %arg12[%c4, %c0_45] : memref<8x32xf32, #tpu.memory_space<vmem>>, vector<2x32xf32>
    tpu.vector_store %arg12[%c4, %c0_45], %245 {strides = array<i32>} : memref<8x32xf32, #tpu.memory_space<vmem>>, vector<2x32xf32>,
    %247 = vector.extract_strided_slice %13 {offsets = [0, 0], sizes = [2, 128], strides = [1, 1]} : vector<8x128xf32> to vector<2x128xf32>
    %248 = arith.truncf %245 : vector<2x32xf32> to vector<2x32xbf16>
    %cst_46 = arith.constant dense<0.000000e+00> : vector<2x128xf32>
    %249 = tpu.matmul %248, %2, %cst_46 {dimension_numbers = #tpu.dot_dimension_numbers<[1], [0], [0], [1], [0, 0, 1, 1], [], []>} : vector<2x32xbf16>, vector<32x128xbf16>, vector<2x128xf32> -> vector<2x128xf32>
    %250 = arith.addf %247, %249 : vector<2x128xf32>
    %251 = arith.negf %250 : vector<2x128xf32>
    %252 = math.exp %251 : vector<2x128xf32>
    %cst_47 = arith.constant 1.000000e+00 : f32
    %253 = vector.broadcast %cst_47 : f32 to vector<2x128xf32>
    %254 = arith.addf %253, %252 : vector<2x128xf32>
    %255 = arith.divf %253, %254 : vector<2x128xf32>
    %256 = math.tanh %250 : vector<2x128xf32>
    %257 = vector.extract_strided_slice %255 {offsets = [0, 0], sizes = [2, 32], strides = [1, 1]} : vector<2x128xf32> to vector<2x32xf32>
    %258 = vector.extract_strided_slice %255 {offsets = [0, 32], sizes = [2, 32], strides = [1, 1]} : vector<2x128xf32> to vector<2x32xf32>
    %259 = vector.extract_strided_slice %256 {offsets = [0, 64], sizes = [2, 32], strides = [1, 1]} : vector<2x128xf32> to vector<2x32xf32>
    %260 = vector.extract_strided_slice %255 {offsets = [0, 96], sizes = [2, 32], strides = [1, 1]} : vector<2x128xf32> to vector<2x32xf32>
    %261 = arith.mulf %258, %243 : vector<2x32xf32>
    %262 = arith.mulf %257, %259 : vector<2x32xf32>
    %263 = arith.addf %261, %262 : vector<2x32xf32>
    %264 = math.tanh %263 : vector<2x32xf32>
    %265 = arith.mulf %260, %264 : vector<2x32xf32>
    %266 = vector.extract_strided_slice %13 {offsets = [2, 0], sizes = [2, 128], strides = [1, 1]} : vector<8x128xf32> to vector<2x128xf32>
    %267 = arith.truncf %265 : vector<2x32xf32> to vector<2x32xbf16>
    %cst_48 = arith.constant dense<0.000000e+00> : vector<2x128xf32>
    %268 = tpu.matmul %267, %2, %cst_48 {dimension_numbers = #tpu.dot_dimension_numbers<[1], [0], [0], [1], [0, 0, 1, 1], [], []>} : vector<2x32xbf16>, vector<32x128xbf16>, vector<2x128xf32> -> vector<2x128xf32>
    %269 = arith.addf %266, %268 : vector<2x128xf32>
    %270 = arith.negf %269 : vector<2x128xf32>
    %271 = math.exp %270 : vector<2x128xf32>
    %cst_49 = arith.constant 1.000000e+00 : f32
    %272 = vector.broadcast %cst_49 : f32 to vector<2x128xf32>
    %273 = arith.addf %272, %271 : vector<2x128xf32>
    %274 = arith.divf %272, %273 : vector<2x128xf32>
    %275 = math.tanh %269 : vector<2x128xf32>
    %276 = vector.extract_strided_slice %274 {offsets = [0, 0], sizes = [2, 32], strides = [1, 1]} : vector<2x128xf32> to vector<2x32xf32>
    %277 = vector.extract_strided_slice %274 {offsets = [0, 32], sizes = [2, 32], strides = [1, 1]} : vector<2x128xf32> to vector<2x32xf32>
    %278 = vector.extract_strided_slice %275 {offsets = [0, 64], sizes = [2, 32], strides = [1, 1]} : vector<2x128xf32> to vector<2x32xf32>
    %279 = vector.extract_strided_slice %274 {offsets = [0, 96], sizes = [2, 32], strides = [1, 1]} : vector<2x128xf32> to vector<2x32xf32>
    %280 = arith.mulf %277, %263 : vector<2x32xf32>
    %281 = arith.mulf %276, %278 : vector<2x32xf32>
    %282 = arith.addf %280, %281 : vector<2x32xf32>
    %283 = math.tanh %282 : vector<2x32xf32>
    %284 = arith.mulf %279, %283 : vector<2x32xf32>
    %285 = vector.extract_strided_slice %13 {offsets = [4, 0], sizes = [2, 128], strides = [1, 1]} : vector<8x128xf32> to vector<2x128xf32>
    %286 = arith.truncf %284 : vector<2x32xf32> to vector<2x32xbf16>
    %cst_50 = arith.constant dense<0.000000e+00> : vector<2x128xf32>
    %287 = tpu.matmul %286, %2, %cst_50 {dimension_numbers = #tpu.dot_dimension_numbers<[1], [0], [0], [1], [0, 0, 1, 1], [], []>} : vector<2x32xbf16>, vector<32x128xbf16>, vector<2x128xf32> -> vector<2x128xf32>
    %288 = arith.addf %285, %287 : vector<2x128xf32>
    %289 = arith.negf %288 : vector<2x128xf32>
    %290 = math.exp %289 : vector<2x128xf32>
    %cst_51 = arith.constant 1.000000e+00 : f32
    %291 = vector.broadcast %cst_51 : f32 to vector<2x128xf32>
    %292 = arith.addf %291, %290 : vector<2x128xf32>
    %293 = arith.divf %291, %292 : vector<2x128xf32>
    %294 = math.tanh %288 : vector<2x128xf32>
    %295 = vector.extract_strided_slice %293 {offsets = [0, 0], sizes = [2, 32], strides = [1, 1]} : vector<2x128xf32> to vector<2x32xf32>
    %296 = vector.extract_strided_slice %293 {offsets = [0, 32], sizes = [2, 32], strides = [1, 1]} : vector<2x128xf32> to vector<2x32xf32>
    %297 = vector.extract_strided_slice %294 {offsets = [0, 64], sizes = [2, 32], strides = [1, 1]} : vector<2x128xf32> to vector<2x32xf32>
    %298 = vector.extract_strided_slice %293 {offsets = [0, 96], sizes = [2, 32], strides = [1, 1]} : vector<2x128xf32> to vector<2x32xf32>
    %299 = arith.mulf %296, %282 : vector<2x32xf32>
    %300 = arith.mulf %295, %297 : vector<2x32xf32>
    %301 = arith.addf %299, %300 : vector<2x32xf32>
    %302 = math.tanh %301 : vector<2x32xf32>
    %303 = arith.mulf %298, %302 : vector<2x32xf32>
    %c6 = arith.constant 6 : index
    %c0_52 = arith.constant 0 : index
    %304 = vector.load %arg12[%c6, %c0_52] : memref<8x32xf32, #tpu.memory_space<vmem>>, vector<2x32xf32>
    tpu.vector_store %arg12[%c6, %c0_52], %303 {strides = array<i32>} : memref<8x32xf32, #tpu.memory_space<vmem>>, vector<2x32xf32>,
    %c0_53 = arith.constant 0 : index
    %c0_54 = arith.constant 0 : index
    %305 = vector.load %arg12[%c0_53, %c0_54] : memref<8x32xf32, #tpu.memory_space<vmem>>, vector<8x32xf32>
    %c0_55 = arith.constant 0 : index
    %c0_56 = arith.constant 0 : index
    %306 = vector.load %arg9[%c0_55, %c0_56] : memref<32x128xf32, #tpu.memory_space<vmem>>, vector<32x128xf32>
    %cst_57 = arith.constant dense<0.000000e+00> : vector<8x128xf32>
    %307 = tpu.matmul %305, %306, %cst_57 {dimension_numbers = #tpu.dot_dimension_numbers<[1], [0], [0], [1], [0, 0, 1, 1], [], []>} : vector<8x32xf32>, vector<32x128xf32>, vector<8x128xf32> -> vector<8x128xf32>
    %c0_58 = arith.constant 0 : index
    %c0_59 = arith.constant 0 : index
    %308 = vector.load %arg10[%c0_58, %c0_59] : memref<1x128xf32, #tpu.memory_space<vmem>>, vector<1x128xf32>
    %309 = vector.broadcast %308 : vector<1x128xf32> to vector<8x128xf32>
    %310 = arith.addf %307, %309 : vector<8x128xf32>
    %c0_60 = arith.constant 0 : index
    %c0_61 = arith.constant 0 : index
    %311 = vector.load %arg11[%c0_60, %c0_61] : memref<8x128xf32, #tpu.memory_space<vmem>>, vector<8x128xf32>
    tpu.vector_store %arg11[%c0_60, %c0_61], %310 {strides = array<i32>} : memref<8x128xf32, #tpu.memory_space<vmem>>, vector<8x128xf32>,
    return
  }
  func.func @transform_0(%arg0: i32) -> (i32, i32) {
    %c0_i32 = arith.constant 0 : i32
    %c0_i32_0 = arith.constant 0 : i32
    %c0_i32_1 = arith.constant 0 : i32
    return %c0_i32, %c0_i32_0 : i32, i32
  }
  func.func @transform_1(%arg0: i32) -> (i32, i32) {
    %c0_i32 = arith.constant 0 : i32
    %c0_i32_0 = arith.constant 0 : i32
    %c0_i32_1 = arith.constant 0 : i32
    return %c0_i32, %c0_i32_0 : i32, i32
  }
  func.func @transform_2(%arg0: i32) -> (i32, i32) {
    %c0_i32 = arith.constant 0 : i32
    %c0_i32_0 = arith.constant 0 : i32
    %c0_i32_1 = arith.constant 0 : i32
    return %c0_i32, %c0_i32_0 : i32, i32
  }
  func.func @transform_3(%arg0: i32) -> (i32, i32) {
    %c0_i32 = arith.constant 0 : i32
    %c0_i32_0 = arith.constant 0 : i32
    %c0_i32_1 = arith.constant 0 : i32
    return %c0_i32, %c0_i32_0 : i32, i32
  }
  func.func @transform_4(%arg0: i32) -> (i32, i32) {
    %c0_i32 = arith.constant 0 : i32
    %c0_i32_0 = arith.constant 0 : i32
    %c0_i32_1 = arith.constant 0 : i32
    return %c0_i32, %c0_i32_0 : i32, i32
  }
  func.func @transform_5(%arg0: i32) -> (i32, i32) {
    %c0_i32 = arith.constant 0 : i32
    %c0_i32_0 = arith.constant 0 : i32
    %c0_i32_1 = arith.constant 0 : i32
    return %c0_i32, %c0_i32_0 : i32, i32
  }
  func.func @transform_6(%arg0: i32) -> (i32, i32) {
    %c0_i32 = arith.constant 0 : i32
    %c0_i32_0 = arith.constant 0 : i32
    %c0_i32_1 = arith.constant 0 : i32
    return %c0_i32, %c0_i32_0 : i32, i32
  }
  func.func @transform_7(%arg0: i32) -> (i32, i32) {
    %c0_i32 = arith.constant 0 : i32
    %c0_i32_0 = arith.constant 0 : i32
    %c0_i32_1 = arith.constant 0 : i32
    return %c0_i32, %c0_i32_0 : i32, i32
  }
  func.func @transform_8(%arg0: i32) -> (i32, i32) {
    %c0_i32 = arith.constant 0 : i32
    %c0_i32_0 = arith.constant 0 : i32
    %c0_i32_1 = arith.constant 0 : i32
    return %c0_i32, %c0_i32_0 : i32, i32
  }
  func.func @transform_9(%arg0: i32) -> (i32, i32) {
    %c0_i32 = arith.constant 0 : i32
    %c0_i32_0 = arith.constant 0 : i32
    %c0_i32_1 = arith.constant 0 : i32
    return %c0_i32, %c0_i32_0 : i32, i32
  }
  func.func @transform_10(%arg0: i32) -> (i32, i32) {
    %c0_i32 = arith.constant 0 : i32
    %c0_i32_0 = arith.constant 0 : i32
    %c0_i32_1 = arith.constant 0 : i32
    return %c0_i32, %c0_i32_0 : i32, i32
  }
}

</mosaic_0001>

<llo_original>
// kernel: tpu_custom_call.1
$region0: #{tpu_custom_call.1}
  #allocation0 [shape = 'u32[]', space=smem, size = 0x4, offset = 0x4, fixed_abs, tag = 'smem constant byte address 0x4 - core index']
  #allocation1 [shape = 'u32[144,128]{1,0:T(1,128)}', space=vmem, size = 0x12000, scoped, tag = 'internal scratch']
  #allocation2 [shape = 'f32[8,32]{1,0:T(8,128)}', space=vmem, size = 0x1000, scoped, tag = 'scratch operand']
  %s0 = inlined_call_operand.hbm [shape: f32[16,32], index: 0, kind: input, shape index: {}]
  %s1 = inlined_call_operand.hbm [shape: f32[8,128], index: 1, kind: input, shape index: {}]
  %s2 = inlined_call_operand.hbm [shape: f32[32,128], index: 2, kind: input, shape index: {}]
  %s3 = inlined_call_operand.hbm [shape: bf16[32,128], index: 3, kind: input, shape index: {}]
  %s4 = inlined_call_operand.vmem [shape: f32[1,128], index: 4, kind: input, shape index: {}]
  %s5 = inlined_call_operand.hbm [shape: f32[128,128], index: 5, kind: input, shape index: {}]
  %s6 = inlined_call_operand.hbm [shape: bf16[32,128], index: 6, kind: input, shape index: {}]
  %s7 = inlined_call_operand.vmem [shape: f32[1,128], index: 7, kind: input, shape index: {}]
  %s8 = inlined_call_operand.hbm [shape: f32[32,128], index: 8, kind: input, shape index: {}]
  %s9 = inlined_call_operand.vmem [shape: f32[1,128], index: 9, kind: input, shape index: {}]
  %s10 = inlined_call_operand.hbm [shape: f32[8,128], index: 10, kind: output, shape index: {}]
  %s11 = sld [smem:[#allocation0]]
  $region78: #{tpu_custom_call.1} parent=0
    _
  %s13 = ssub.s32 1, %s11
  %s14 = scalar_select 0, %s13, %s11
  $region1: #{tpu_custom_call.1} parent=0
    #allocation3 [shape = 'u8[8192]{0}', space=vmem, size = 0x2000, scoped, tag = 'input window, operand 0, single buffered']
    #allocation4 [shape = 's32[1]{0}', space=sflag, size = 0x4, scoped, tag = 'scoped memory for tpu_custom_call.1']
    #allocation5 [shape = 's32[1]{0}', space=sflag, size = 0x4, scoped, tag = 'scoped memory for tpu_custom_call.1']
    #allocation6 [shape = 'u8[4096]{0}', space=vmem, size = 0x1000, scoped, tag = 'input window, operand 1, single buffered']
    #allocation7 [shape = 's32[1]{0}', space=sflag, size = 0x4, scoped, tag = 'scoped memory for tpu_custom_call.1']
    #allocation8 [shape = 'u8[16384]{0}', space=vmem, size = 0x4000, scoped, tag = 'input window, operand 2, single buffered']
    #allocation9 [shape = 'u8[8192]{0}', space=vmem, size = 0x2000, scoped, tag = 'input window, operand 3, single buffered']
    #allocation10 [shape = 's32[1]{0}', space=sflag, size = 0x4, scoped, tag = 'scoped memory for tpu_custom_call.1']
    #allocation11 [shape = 'u8[65536]{0}', space=vmem, size = 0x10000, scoped, tag = 'input window, operand 5, single buffered']
    #allocation12 [shape = 'u8[8192]{0}', space=vmem, size = 0x2000, scoped, tag = 'input window, operand 6, single buffered']
    #allocation13 [shape = 's32[1]{0}', space=sflag, size = 0x4, scoped, tag = 'scoped memory for tpu_custom_call.1']
    #allocation14 [shape = 'u8[16384]{0}', space=vmem, size = 0x4000, scoped, tag = 'input window, operand 8, single buffered']
    #allocation15 [shape = 'u8[4096]{0}', space=vmem, size = 0x1000, scoped, tag = 'output window, operand 0, single buffered']
    %15 = vsyncpa [#allocation4], 0
    %16 = vsyncpa [#allocation7], 0
    %17 = vsyncpa [#allocation10], 0
    %18 = vsyncpa [#allocation13], 0
    %19 = vsyncpa [#allocation5], 0
    // Predicated region
    $region2: #{tpu_custom_call.1} parent=1 // pred_check
      _
    $region3: #{tpu_custom_call.1} parent=1 // pred_check_branch
      %21 = sbr.rel (0) target = $region5
    $region4: #{tpu_custom_call.1} parent=1 // pred_region
      %s23 = ssub.s32 256, 256
      %24 = vsyncadd [#allocation4], %s23
      %s25 = sshll.u32 [#allocation3], 4
      %s26 = int_to_ptr.vmem [resolvable:$true] %s25
      %31 = dma.hbm_to_vmem [thread:$0]  %s0, 256, %s26, [#allocation4], 128, 128, 8
    $region5: #{tpu_custom_call.1} parent=1 // pred_fallthru
      _
    // Predicated region
    $region6: #{tpu_custom_call.1} parent=1 // pred_check
      _
    $region7: #{tpu_custom_call.1} parent=1 // pred_check_branch
      %33 = sbr.rel (0) target = $region9
    $region8: #{tpu_custom_call.1} parent=1 // pred_region
      %s35 = ssub.s32 128, 128
      %36 = vsyncadd [#allocation7], %s35
      %s38 = sshll.u32 [#allocation6], 4
      %s39 = int_to_ptr.vmem [resolvable:$true] %s38
      %41 = dma.hbm_to_vmem [thread:$0]  %s1, 128, %s39, [#allocation7]
    $region9: #{tpu_custom_call.1} parent=1 // pred_fallthru
      _
    // Predicated region
    $region10: #{tpu_custom_call.1} parent=1 // pred_check
      _
    $region11: #{tpu_custom_call.1} parent=1 // pred_check_branch
      %43 = sbr.rel (0) target = $region13
    $region12: #{tpu_custom_call.1} parent=1 // pred_region
      %s45 = ssub.s32 512, 512
      %46 = vsyncadd [#allocation7], %s45
      %s47 = sshll.u32 [#allocation8], 4
      %s48 = int_to_ptr.vmem [resolvable:$true] %s47
      %53 = dma.hbm_to_vmem [thread:$0]  %s2, 512, %s48, [#allocation7], 128, 128, 8
    $region13: #{tpu_custom_call.1} parent=1 // pred_fallthru
      _
    // Predicated region
    $region14: #{tpu_custom_call.1} parent=1 // pred_check
      _
    $region15: #{tpu_custom_call.1} parent=1 // pred_check_branch
      %55 = sbr.rel (0) target = $region17
    $region16: #{tpu_custom_call.1} parent=1 // pred_region
      %s57 = ssub.s32 256, 256
      %58 = vsyncadd [#allocation10], %s57
      %s59 = sshll.u32 [#allocation9], 4
      %s60 = int_to_ptr.vmem [resolvable:$true] %s59
      %65 = dma.hbm_to_vmem [thread:$0]  %s3, 256, %s60, [#allocation10], 64, 64, 4
    $region17: #{tpu_custom_call.1} parent=1 // pred_fallthru
      _
    // Predicated region
    $region18: #{tpu_custom_call.1} parent=1 // pred_check
      _
    $region19: #{tpu_custom_call.1} parent=1 // pred_check_branch
      %67 = sbr.rel (0) target = $region21
    $region20: #{tpu_custom_call.1} parent=1 // pred_region
      _
    $region21: #{tpu_custom_call.1} parent=1 // pred_fallthru
      _
    // Predicated region
    $region22: #{tpu_custom_call.1} parent=1 // pred_check
      _
    $region23: #{tpu_custom_call.1} parent=1 // pred_check_branch
      %69 = sbr.rel (0) target = $region25
    $region24: #{tpu_custom_call.1} parent=1 // pred_region
      %s71 = ssub.s32 2048, 2048
      %72 = vsyncadd [#allocation10], %s71
      %s73 = sshll.u32 [#allocation11], 4
      %s74 = int_to_ptr.vmem [resolvable:$true] %s73
      %79 = dma.hbm_to_vmem [thread:$0]  %s5, 2048, %s74, [#allocation10], 128, 128, 8
    $region25: #{tpu_custom_call.1} parent=1 // pred_fallthru
      _
    // Predicated region
    $region26: #{tpu_custom_call.1} parent=1 // pred_check
      _
    $region27: #{tpu_custom_call.1} parent=1 // pred_check_branch
      %81 = sbr.rel (0) target = $region29
    $region28: #{tpu_custom_call.1} parent=1 // pred_region
      %s83 = ssub.s32 256, 256
      %84 = vsyncadd [#allocation13], %s83
      %s85 = sshll.u32 [#allocation12], 4
      %s86 = int_to_ptr.vmem [resolvable:$true] %s85
      %91 = dma.hbm_to_vmem [thread:$0]  %s6, 256, %s86, [#allocation13], 64, 64, 4
    $region29: #{tpu_custom_call.1} parent=1 // pred_fallthru
      _
    // Predicated region
    $region30: #{tpu_custom_call.1} parent=1 // pred_check
      _
    $region31: #{tpu_custom_call.1} parent=1 // pred_check_branch
      %93 = sbr.rel (0) target = $region33
    $region32: #{tpu_custom_call.1} parent=1 // pred_region
      _
    $region33: #{tpu_custom_call.1} parent=1 // pred_fallthru
      _
    // Predicated region
    $region34: #{tpu_custom_call.1} parent=1 // pred_check
      _
    $region35: #{tpu_custom_call.1} parent=1 // pred_check_branch
      %95 = sbr.rel (0) target = $region37
    $region36: #{tpu_custom_call.1} parent=1 // pred_region
      %s97 = ssub.s32 512, 512
      %98 = vsyncadd [#allocation13], %s97
      %s99 = sshll.u32 [#allocation14], 4
      %s100 = int_to_ptr.vmem [resolvable:$true] %s99
      %105 = dma.hbm_to_vmem [thread:$0]  %s8, 512, %s100, [#allocation13], 128, 128, 8
    $region37: #{tpu_custom_call.1} parent=1 // pred_fallthru
      _
    // Predicated region
    $region38: #{tpu_custom_call.1} parent=1 // pred_check
      _
    $region39: #{tpu_custom_call.1} parent=1 // pred_check_branch
      %107 = sbr.rel (0) target = $region41
    $region40: #{tpu_custom_call.1} parent=1 // pred_region
      _
    $region41: #{tpu_custom_call.1} parent=1 // pred_fallthru
      _
    // Predicated region
    $region42: #{tpu_custom_call.1} parent=1 // pred_check
      _
    $region43: #{tpu_custom_call.1} parent=1 // pred_check_branch
      %109 = sbr.rel (0) target = $region45
    $region44: #{tpu_custom_call.1} parent=1 // pred_region
      %110 = dma.done [#allocation4], 256
    $region45: #{tpu_custom_call.1} parent=1 // pred_fallthru
      _
    // Predicated region
    $region46: #{tpu_custom_call.1} parent=1 // pred_check
      _
    $region47: #{tpu_custom_call.1} parent=1 // pred_check_branch
      %112 = sbr.rel (0) target = $region49
    $region48: #{tpu_custom_call.1} parent=1 // pred_region
      %113 = dma.done [#allocation7], 128
    $region49: #{tpu_custom_call.1} parent=1 // pred_fallthru
      _
    // Predicated region
    $region50: #{tpu_custom_call.1} parent=1 // pred_check
      _
    $region51: #{tpu_custom_call.1} parent=1 // pred_check_branch
      %115 = sbr.rel (0) target = $region53
    $region52: #{tpu_custom_call.1} parent=1 // pred_region
      %116 = dma.done [#allocation7], 512
    $region53: #{tpu_custom_call.1} parent=1 // pred_fallthru
      _
    // Predicated region
    $region54: #{tpu_custom_call.1} parent=1 // pred_check
      _
    $region55: #{tpu_custom_call.1} parent=1 // pred_check_branch
      %118 = sbr.rel (0) target = $region57
    $region56: #{tpu_custom_call.1} parent=1 // pred_region
      %119 = dma.done [#allocation10], 256
    $region57: #{tpu_custom_call.1} parent=1 // pred_fallthru
      _
    // Predicated region
    $region58: #{tpu_custom_call.1} parent=1 // pred_check
      _
    $region59: #{tpu_custom_call.1} parent=1 // pred_check_branch
      %121 = sbr.rel (0) target = $region61
    $region60: #{tpu_custom_call.1} parent=1 // pred_region
      %122 = dma.done [#allocation10], 2048
    $region61: #{tpu_custom_call.1} parent=1 // pred_fallthru
      _
    // Predicated region
    $region62: #{tpu_custom_call.1} parent=1 // pred_check
      _
    $region63: #{tpu_custom_call.1} parent=1 // pred_check_branch
      %124 = sbr.rel (0) target = $region65
    $region64: #{tpu_custom_call.1} parent=1 // pred_region
      %125 = dma.done [#allocation13], 256
    $region65: #{tpu_custom_call.1} parent=1 // pred_fallthru
      _
    // Predicated region
    $region66: #{tpu_custom_call.1} parent=1 // pred_check
      _
    $region67: #{tpu_custom_call.1} parent=1 // pred_check_branch
      %127 = sbr.rel (0) target = $region69
    $region68: #{tpu_custom_call.1} parent=1 // pred_region
      %128 = dma.done [#allocation13], 512
    $region69: #{tpu_custom_call.1} parent=1 // pred_fallthru
      _
    %v130 = vld [vmem:[%s7] sm:$0x1]
    %v131 = vld [vmem:[#allocation9] sm:$0xf]
    %v132 = vld [vmem:[#allocation9 + $0x4] sm:$0xf]
    %v133 = vld [vmem:[#allocation9 + $0x8] sm:$0xf]
    %v134 = vld [vmem:[#allocation9 + $0xc] sm:$0xf]
    %v135 = vld [vmem:[#allocation12] sm:$0xf]
    %v136 = vld [vmem:[#allocation12 + $0x4] sm:$0xf]
    %v137 = vld [vmem:[#allocation12 + $0x8] sm:$0xf]
    %v138 = vld [vmem:[#allocation12 + $0xc] sm:$0xf]
    %v139 = vld [vmem:[#allocation3] sm:$0xff]
    %v140 = vld [vmem:[#allocation3 + $0x8] sm:$0xff]
    %v141 = vld [vmem:[#allocation8] sm:$0xff]
    %v142 = vld [vmem:[#allocation8 + $0x8] sm:$0xff]
    %v143 = vld [vmem:[#allocation8 + $0x10] sm:$0xff]
    %v144 = vld [vmem:[#allocation8 + $0x18] sm:$0xff]
    %v145 = vld [vmem:[%s4] sm:$0x1]
    %v147 = vlaneseq
    %v148 = vshrl.u32 %v147, 7
    %v149 = vsub.s32 0, %v148
    %v150 = vrot.slane %v145, %v149
    %vm152 = vcmask 261120
    %v154 = vsel %vm152, %v139, 0
    %v157 = vsel %vm152, %v140, 0
    %159 = vmatprep.subr.mxu0 0.0
    %160 = vmatpush1.msra.mxu0 0.0
    %161 = vmatprep.subr.mxu0 0.0
    %162 = vmatpush1.msra.mxu0 0.0
    %163 = vmatprep.subr.mxu0 0.0
    %164 = vmatpush1.msra.mxu0 0.0
    %165 = vmatprep.subr.mxu0 0.0
    %166 = vmatpush1.msra.mxu0 0.0
    %167 = vmatprep.subr.mxu0 0.0
    %168 = vmatpush1.msra.mxu0 0.0
    %169 = vmatprep.subr.mxu0 0.0
    %170 = vmatpush1.msra.mxu0 0.0
    %171 = vmatprep.subr.mxu0 0.0
    %172 = vmatpush1.msra.mxu0 0.0
    %173 = vmatprep.subr.mxu0 0.0
    %174 = vmatpush1.msra.mxu0 0.0
    %175 = vmatprep.subr.mxu0 0.0
    %176 = vmatpush1.msra.mxu0 0.0
    %177 = vmatprep.subr.mxu0 0.0
    %178 = vmatpush1.msra.mxu0 0.0
    %179 = vmatprep.subr.mxu0 0.0
    %180 = vmatpush1.msra.mxu0 0.0
    %181 = vmatprep.subr.mxu0 0.0
    %182 = vmatpush1.msra.mxu0 0.0
    %183 = vmatprep.subr.mxu0 0.0
    %184 = vmatpush1.msra.mxu0 %v144
    %185 = vmatprep.subr.mxu0 0.0
    %186 = vmatpush1.msra.mxu0 %v143
    %187 = vmatprep.subr.mxu0 0.0
    %188 = vmatpush1.msra.mxu0 %v142
    %189 = vmatprep.subr.mxu0 0.0
    %190 = vmatpush1.msra.mxu0 %v141
    %191 = vmatprep.subr.mxu0 0.0
    %192 = vmatpush2.msra.mxu0 0.0
    %193 = vmatprep.subr.mxu0 0.0
    %194 = vmatpush2.msra.mxu0 0.0
    %195 = vmatprep.subr.mxu0 0.0
    %196 = vmatpush2.msra.mxu0 0.0
    %197 = vmatprep.subr.mxu0 0.0
    %198 = vmatpush2.msra.mxu0 0.0
    %199 = vmatprep.subr.mxu0 0.0
    %200 = vmatpush2.msra.mxu0 0.0
    %201 = vmatprep.subr.mxu0 0.0
    %202 = vmatpush2.msra.mxu0 0.0
    %203 = vmatprep.subr.mxu0 0.0
    %204 = vmatpush2.msra.mxu0 0.0
    %205 = vmatprep.subr.mxu0 0.0
    %206 = vmatpush2.msra.mxu0 0.0
    %207 = vmatprep.subr.mxu0 0.0
    %208 = vmatpush2.msra.mxu0 0.0
    %209 = vmatprep.subr.mxu0 0.0
    %210 = vmatpush2.msra.mxu0 0.0
    %211 = vmatprep.subr.mxu0 0.0
    %212 = vmatpush2.msra.mxu0 0.0
    %213 = vmatprep.subr.mxu0 0.0
    %214 = vmatpush2.msra.mxu0 0.0
    %215 = vmatprep.subr.mxu0 0.0
    %216 = vmatpush2.msra.mxu0 0.0
    %217 = vmatprep.subr.mxu0 0.0
    %218 = vmatpush2.msra.mxu0 0.0
    %219 = vmatprep.subr.mxu0 0.0
    %220 = vmatpush2.msra.mxu0 0.0
    %221 = vmatprep.subr.mxu0 0.0
    %222 = vmatpush2.msra.mxu0 0.0
    %223 = vmatprep.mubr.f32.mxu0 0.0
    %224 = vmatmul.mubr.f32.gmra.mxu0 %v154
    %v225 = vpop.f32.mrf.mxu0
    %v226 = vadd.f32 %v150, %v225
    %v227 = vpop.f32.mrf.mxu0
    %228 = vmatprep.mubr.f32.mxu0 0.0
    %229 = vmatmul.mubr.f32.gmra.mxu0 %v157
    %v230 = vpop.f32.mrf.mxu0
    %v231 = vadd.f32 %v150, %v230
    %v232 = vpop.f32.mrf.mxu0
    %233 = vdwg.mxu0
    %v234 = vld [vmem:[#allocation6] sm:$0xff]
    %v235 = vld [vmem:[#allocation11] sm:$0xff]
    %v236 = vld [vmem:[#allocation11 + $0x8] sm:$0xff]
    %v237 = vld [vmem:[#allocation11 + $0x10] sm:$0xff]
    %v238 = vld [vmem:[#allocation11 + $0x18] sm:$0xff]
    %v239 = vld [vmem:[#allocation11 + $0x20] sm:$0xff]
    %v240 = vld [vmem:[#allocation11 + $0x28] sm:$0xff]
    %v241 = vld [vmem:[#allocation11 + $0x30] sm:$0xff]
    %v242 = vld [vmem:[#allocation11 + $0x38] sm:$0xff]
    %v243 = vld [vmem:[#allocation11 + $0x40] sm:$0xff]
    %v244 = vld [vmem:[#allocation11 + $0x48] sm:$0xff]
    %v245 = vld [vmem:[#allocation11 + $0x50] sm:$0xff]
    %v246 = vld [vmem:[#allocation11 + $0x58] sm:$0xff]
    %v247 = vld [vmem:[#allocation11 + $0x60] sm:$0xff]
    %v248 = vld [vmem:[#allocation11 + $0x68] sm:$0xff]
    %v249 = vld [vmem:[#allocation11 + $0x70] sm:$0xff]
    %v250 = vld [vmem:[#allocation11 + $0x78] sm:$0xff]
    %v252 = vlaneseq
    %v253 = vshrl.u32 %v252, 7
    %v254 = vsub.s32 0, %v253
    %v255 = vrot.slane %v130, %v254
    %257 = vmatprep.subr.mxu0 0.0
    %258 = vmatpush1.msra.mxu0 %v250
    %259 = vmatprep.subr.mxu0 0.0
    %260 = vmatpush1.msra.mxu0 %v249
    %261 = vmatprep.subr.mxu0 0.0
    %262 = vmatpush1.msra.mxu0 %v248
    %263 = vmatprep.subr.mxu0 0.0
    %264 = vmatpush1.msra.mxu0 %v247
    %265 = vmatprep.subr.mxu0 0.0
    %266 = vmatpush1.msra.mxu0 %v246
    %267 = vmatprep.subr.mxu0 0.0
    %268 = vmatpush1.msra.mxu0 %v245
    %269 = vmatprep.subr.mxu0 0.0
    %270 = vmatpush1.msra.mxu0 %v244
    %271 = vmatprep.subr.mxu0 0.0
    %272 = vmatpush1.msra.mxu0 %v243
    %273 = vmatprep.subr.mxu0 0.0
    %274 = vmatpush1.msra.mxu0 %v242
    %275 = vmatprep.subr.mxu0 0.0
    %276 = vmatpush1.msra.mxu0 %v241
    %277 = vmatprep.subr.mxu0 0.0
    %278 = vmatpush1.msra.mxu0 %v240
    %279 = vmatprep.subr.mxu0 0.0
    %280 = vmatpush1.msra.mxu0 %v239
    %281 = vmatprep.subr.mxu0 0.0
    %282 = vmatpush1.msra.mxu0 %v238
    %283 = vmatprep.subr.mxu0 0.0
    %284 = vmatpush1.msra.mxu0 %v237
    %285 = vmatprep.subr.mxu0 0.0
    %286 = vmatpush1.msra.mxu0 %v236
    %287 = vmatprep.subr.mxu0 0.0
    %288 = vmatpush1.msra.mxu0 %v235
    %289 = vmatprep.subr.mxu0 0.0
    %290 = vmatpush2.msra.mxu0 0.0
    %291 = vmatprep.subr.mxu0 0.0
    %292 = vmatpush2.msra.mxu0 0.0
    %293 = vmatprep.subr.mxu0 0.0
    %294 = vmatpush2.msra.mxu0 0.0
    %295 = vmatprep.subr.mxu0 0.0
    %296 = vmatpush2.msra.mxu0 0.0
    %297 = vmatprep.subr.mxu0 0.0
    %298 = vmatpush2.msra.mxu0 0.0
    %299 = vmatprep.subr.mxu0 0.0
    %300 = vmatpush2.msra.mxu0 0.0
    %301 = vmatprep.subr.mxu0 0.0
    %302 = vmatpush2.msra.mxu0 0.0
    %303 = vmatprep.subr.mxu0 0.0
    %304 = vmatpush2.msra.mxu0 0.0
    %305 = vmatprep.subr.mxu0 0.0
    %306 = vmatpush2.msra.mxu0 0.0
    %307 = vmatprep.subr.mxu0 0.0
    %308 = vmatpush2.msra.mxu0 0.0
    %309 = vmatprep.subr.mxu0 0.0
    %310 = vmatpush2.msra.mxu0 0.0
    %311 = vmatprep.subr.mxu0 0.0
    %312 = vmatpush2.msra.mxu0 0.0
    %313 = vmatprep.subr.mxu0 0.0
    %314 = vmatpush2.msra.mxu0 0.0
    %315 = vmatprep.subr.mxu0 0.0
    %316 = vmatpush2.msra.mxu0 0.0
    %317 = vmatprep.subr.mxu0 0.0
    %318 = vmatpush2.msra.mxu0 0.0
    %319 = vmatprep.subr.mxu0 0.0
    %320 = vmatpush2.msra.mxu0 0.0
    %321 = vmatprep.mubr.f32.mxu0 0.0
    %322 = vmatmul.mubr.f32.gmra.mxu0 %v234
    %v323 = vpop.f32.mrf.mxu0
    %v324 = vadd.f32 %v255, %v323
    %v325 = vpop.f32.mrf.mxu0
    %326 = vdwg.mxu0
    %v331 = vunpack.c.l.b16 %v131
    %v332 = vunpack.c.l.b16 %v132
    %v333 = vunpack.c.l.b16 %v133
    %v334 = vunpack.c.l.b16 %v134
    %v335 = vpack.c.b16 %v332, %v331
    %v336 = vpack.c.b16 %v334, %v333
    %v340 = vsel %vm152, 0, 0
    %342 = vmatprep.subr.bf16.mxu0 0
    %343 = vmatpush1.bf16.msra.mxu0 0
    %344 = vmatprep.subr.bf16.mxu0 0
    %345 = vmatpush1.bf16.msra.mxu0 0
    %346 = vmatprep.subr.bf16.mxu0 0
    %347 = vmatpush1.bf16.msra.mxu0 0
    %348 = vmatprep.subr.bf16.mxu0 0
    %349 = vmatpush1.bf16.msra.mxu0 0
    %350 = vmatprep.subr.bf16.mxu0 0
    %351 = vmatpush1.bf16.msra.mxu0 0
    %352 = vmatprep.subr.bf16.mxu0 0
    %353 = vmatpush1.bf16.msra.mxu0 0
    %354 = vmatprep.subr.bf16.mxu0 0
    %355 = vmatpush1.bf16.msra.mxu0 %v336
    %356 = vmatprep.subr.bf16.mxu0 0
    %357 = vmatpush1.bf16.msra.mxu0 %v335
    %358 = vmatprep.subr.bf16.mxu0 0
    %359 = vmatpush2.bf16.msra.mxu0 0
    %360 = vmatprep.subr.bf16.mxu0 0
    %361 = vmatpush2.bf16.msra.mxu0 0
    %362 = vmatprep.subr.bf16.mxu0 0
    %363 = vmatpush2.bf16.msra.mxu0 0
    %364 = vmatprep.subr.bf16.mxu0 0
    %365 = vmatpush2.bf16.msra.mxu0 0
    %366 = vmatprep.subr.bf16.mxu0 0
    %367 = vmatpush2.bf16.msra.mxu0 0
    %368 = vmatprep.subr.bf16.mxu0 0
    %369 = vmatpush2.bf16.msra.mxu0 0
    %370 = vmatprep.subr.bf16.mxu0 0
    %371 = vmatpush2.bf16.msra.mxu0 0
    %372 = vmatprep.subr.bf16.mxu0 0
    %373 = vmatpush2.bf16.msra.mxu0 0
    %374 = vmatprep.mubr.bf16.mxu0 0
    %375 = vmatmul.mubr.bf16.gmra.mxu0 %v340
    %v376 = vpop.f32.mrf.mxu0
    %v377 = vadd.f32 0.0, %v376
    %v378 = vpop.f32.mrf.mxu0
    %v379 = vpop.f32.mrf.mxu0
    %v380 = vpop.f32.mrf.mxu0
    %381 = vdwg.mxu0
    %v382 = vadd.f32 %v226, %v377
    %v383 = vxor.u32 %v382, 2147483648
    %v384 = vmul.f32 %v383, 1.442695
    %v385 = vpow.pop %v384
    %v386 = vadd.f32 %v385, 1.0
    %v387 = vrcp.pop %v386
    %v388 = vmul.f32 1.0, %v387
    %v389 = vtanh.pop %v382
    %v390 = vmul.f32 %v388, 0.0
    %392 = vrot.lane.b32.xlu0 %v389, 64
    %v393 = vpop.permute.xlu0 %392
    %v395 = vmul.f32 %v388, %v393
    %397 = vrot.lane.b32.xlu0 %v395, 32
    %v398 = vpop.permute.xlu0 %397
    %v400 = vadd.f32 %v390, %v398
    %v401 = vtanh.pop %v400
    %403 = vrot.lane.b32.xlu0 %v401, 64
    %v404 = vpop.permute.xlu0 %403
    %v406 = vmul.f32 %v388, %v404
    %v407 = vpack.c.bf16 %v406, %v406
    %409 = vrot.lane.b32.xlu0 %v407, 32
    %v410 = vpop.permute.xlu0 %409
    %v412 = vsel %vm152, %v410, 0
    %414 = vmatprep.subr.bf16.mxu0 0
    %415 = vmatpush1.bf16.msra.mxu0 0
    %416 = vmatprep.subr.bf16.mxu0 0
    %417 = vmatpush1.bf16.msra.mxu0 0
    %418 = vmatprep.subr.bf16.mxu0 0
    %419 = vmatpush1.bf16.msra.mxu0 0
    %420 = vmatprep.subr.bf16.mxu0 0
    %421 = vmatpush1.bf16.msra.mxu0 0
    %422 = vmatprep.subr.bf16.mxu0 0
    %423 = vmatpush1.bf16.msra.mxu0 0
    %424 = vmatprep.subr.bf16.mxu0 0
    %425 = vmatpush1.bf16.msra.mxu0 0
    %426 = vmatprep.subr.bf16.mxu0 0
    %427 = vmatpush1.bf16.msra.mxu0 %v336
    %428 = vmatprep.subr.bf16.mxu0 0
    %429 = vmatpush1.bf16.msra.mxu0 %v335
    %430 = vmatprep.subr.bf16.mxu0 0
    %431 = vmatpush2.bf16.msra.mxu0 0
    %432 = vmatprep.subr.bf16.mxu0 0
    %433 = vmatpush2.bf16.msra.mxu0 0
    %434 = vmatprep.subr.bf16.mxu0 0
    %435 = vmatpush2.bf16.msra.mxu0 0
    %436 = vmatprep.subr.bf16.mxu0 0
    %437 = vmatpush2.bf16.msra.mxu0 0
    %438 = vmatprep.subr.bf16.mxu0 0
    %439 = vmatpush2.bf16.msra.mxu0 0
    %440 = vmatprep.subr.bf16.mxu0 0
    %441 = vmatpush2.bf16.msra.mxu0 0
    %442 = vmatprep.subr.bf16.mxu0 0
    %443 = vmatpush2.bf16.msra.mxu0 0
    %444 = vmatprep.subr.bf16.mxu0 0
    %445 = vmatpush2.bf16.msra.mxu0 0
    %446 = vmatprep.mubr.bf16.mxu0 0
    %447 = vmatmul.mubr.bf16.gmra.mxu0 %v412
    %v448 = vpop.f32.mrf.mxu0
    %v449 = vadd.f32 0.0, %v448
    %v450 = vpop.f32.mrf.mxu0
    %v451 = vpop.f32.mrf.mxu0
    %v452 = vpop.f32.mrf.mxu0
    %453 = vdwg.mxu0
    %v455 = vrot.slane %v449, 6
    %v457 = vadd.f32 %v226, %v455
    %v458 = vxor.u32 %v457, 2147483648
    %v459 = vmul.f32 %v458, 1.442695
    %v460 = vpow.pop %v459
    %v461 = vadd.f32 %v460, 1.0
    %v462 = vrcp.pop %v461
    %v463 = vmul.f32 1.0, %v462
    %v464 = vtanh.pop %v457
    %v466 = vrot.slane %v400, 6
    %v468 = vmul.f32 %v463, %v466
    %470 = vrot.lane.b32.xlu0 %v464, 64
    %v471 = vpop.permute.xlu0 %470
    %v473 = vmul.f32 %v463, %v471
    %475 = vrot.lane.b32.xlu0 %v473, 32
    %v476 = vpop.permute.xlu0 %475
    %v478 = vadd.f32 %v468, %v476
    %v479 = vtanh.pop %v478
    %481 = vrot.lane.b32.xlu0 %v479, 64
    %v482 = vpop.permute.xlu0 %481
    %v484 = vmul.f32 %v463, %v482
    %v485 = vpack.c.bf16 %v484, %v484
    %v487 = vrot.slane %v485, 1
    %488 = vrot.lane.b32.xlu0 %v487, 32
    %v489 = vpop.permute.xlu0 %488
    %v491 = vsel %vm152, %v489, 0
    %493 = vmatprep.subr.bf16.mxu0 0
    %494 = vmatpush1.bf16.msra.mxu0 0
    %495 = vmatprep.subr.bf16.mxu0 0
    %496 = vmatpush1.bf16.msra.mxu0 0
    %497 = vmatprep.subr.bf16.mxu0 0
    %498 = vmatpush1.bf16.msra.mxu0 0
    %499 = vmatprep.subr.bf16.mxu0 0
    %500 = vmatpush1.bf16.msra.mxu0 0
    %501 = vmatprep.subr.bf16.mxu0 0
    %502 = vmatpush1.bf16.msra.mxu0 0
    %503 = vmatprep.subr.bf16.mxu0 0
    %504 = vmatpush1.bf16.msra.mxu0 0
    %505 = vmatprep.subr.bf16.mxu0 0
    %506 = vmatpush1.bf16.msra.mxu0 %v336
    %507 = vmatprep.subr.bf16.mxu0 0
    %508 = vmatpush1.bf16.msra.mxu0 %v335
    %509 = vmatprep.subr.bf16.mxu0 0
    %510 = vmatpush2.bf16.msra.mxu0 0
    %511 = vmatprep.subr.bf16.mxu0 0
    %512 = vmatpush2.bf16.msra.mxu0 0
    %513 = vmatprep.subr.bf16.mxu0 0
    %514 = vmatpush2.bf16.msra.mxu0 0
    %515 = vmatprep.subr.bf16.mxu0 0
    %516 = vmatpush2.bf16.msra.mxu0 0
    %517 = vmatprep.subr.bf16.mxu0 0
    %518 = vmatpush2.bf16.msra.mxu0 0
    %519 = vmatprep.subr.bf16.mxu0 0
    %520 = vmatpush2.bf16.msra.mxu0 0
    %521 = vmatprep.subr.bf16.mxu0 0
    %522 = vmatpush2.bf16.msra.mxu0 0
    %523 = vmatprep.subr.bf16.mxu0 0
    %524 = vmatpush2.bf16.msra.mxu0 0
    %525 = vmatprep.mubr.bf16.mxu0 0
    %526 = vmatmul.mubr.bf16.gmra.mxu0 %v491
    %v527 = vpop.f32.mrf.mxu0
    %v528 = vadd.f32 0.0, %v527
    %v529 = vpop.f32.mrf.mxu0
    %v530 = vpop.f32.mrf.mxu0
    %v531 = vpop.f32.mrf.mxu0
    %532 = vdwg.mxu0
    %v534 = vrot.slane %v528, 4
    %v536 = vadd.f32 %v226, %v534
    %v537 = vxor.u32 %v536, 2147483648
    %v538 = vmul.f32 %v537, 1.442695
    %v539 = vpow.pop %v538
    %v540 = vadd.f32 %v539, 1.0
    %v541 = vrcp.pop %v540
    %v542 = vmul.f32 1.0, %v541
    %v543 = vtanh.pop %v536
    %v545 = vrot.slane %v478, 6
    %v547 = vmul.f32 %v542, %v545
    %549 = vrot.lane.b32.xlu0 %v543, 64
    %v550 = vpop.permute.xlu0 %549
    %v552 = vmul.f32 %v542, %v550
    %554 = vrot.lane.b32.xlu0 %v552, 32
    %v555 = vpop.permute.xlu0 %554
    %v557 = vadd.f32 %v547, %v555
    %v558 = vtanh.pop %v557
    %560 = vrot.lane.b32.xlu0 %v558, 64
    %v561 = vpop.permute.xlu0 %560
    %v563 = vmul.f32 %v542, %v561
    %v564 = vpack.c.bf16 %v563, %v563
    %v566 = vrot.slane %v564, 2
    %567 = vrot.lane.b32.xlu0 %v566, 32
    %v568 = vpop.permute.xlu0 %567
    %v570 = vsel %vm152, %v568, 0
    %572 = vmatprep.subr.bf16.mxu0 0
    %573 = vmatpush1.bf16.msra.mxu0 0
    %574 = vmatprep.subr.bf16.mxu0 0
    %575 = vmatpush1.bf16.msra.mxu0 0
    %576 = vmatprep.subr.bf16.mxu0 0
    %577 = vmatpush1.bf16.msra.mxu0 0
    %578 = vmatprep.subr.bf16.mxu0 0
    %579 = vmatpush1.bf16.msra.mxu0 0
    %580 = vmatprep.subr.bf16.mxu0 0
    %581 = vmatpush1.bf16.msra.mxu0 0
    %582 = vmatprep.subr.bf16.mxu0 0
    %583 = vmatpush1.bf16.msra.mxu0 0
    %584 = vmatprep.subr.bf16.mxu0 0
    %585 = vmatpush1.bf16.msra.mxu0 %v336
    %586 = vmatprep.subr.bf16.mxu0 0
    %587 = vmatpush1.bf16.msra.mxu0 %v335
    %588 = vmatprep.subr.bf16.mxu0 0
    %589 = vmatpush2.bf16.msra.mxu0 0
    %590 = vmatprep.subr.bf16.mxu0 0
    %591 = vmatpush2.bf16.msra.mxu0 0
    %592 = vmatprep.subr.bf16.mxu0 0
    %593 = vmatpush2.bf16.msra.mxu0 0
    %594 = vmatprep.subr.bf16.mxu0 0
    %595 = vmatpush2.bf16.msra.mxu0 0
    %596 = vmatprep.subr.bf16.mxu0 0
    %597 = vmatpush2.bf16.msra.mxu0 0
    %598 = vmatprep.subr.bf16.mxu0 0
    %599 = vmatpush2.bf16.msra.mxu0 0
    %600 = vmatprep.subr.bf16.mxu0 0
    %601 = vmatpush2.bf16.msra.mxu0 0
    %602 = vmatprep.subr.bf16.mxu0 0
    %603 = vmatpush2.bf16.msra.mxu0 0
    %604 = vmatprep.mubr.bf16.mxu0 0
    %605 = vmatmul.mubr.bf16.gmra.mxu0 %v570
    %v606 = vpop.f32.mrf.mxu0
    %v607 = vadd.f32 0.0, %v606
    %v608 = vpop.f32.mrf.mxu0
    %v609 = vpop.f32.mrf.mxu0
    %v610 = vpop.f32.mrf.mxu0
    %611 = vdwg.mxu0
    %v613 = vrot.slane %v607, 2
    %v615 = vadd.f32 %v226, %v613
    %v616 = vxor.u32 %v615, 2147483648
    %v617 = vmul.f32 %v616, 1.442695
    %v618 = vpow.pop %v617
    %v619 = vadd.f32 %v618, 1.0
    %v620 = vrcp.pop %v619
    %v621 = vmul.f32 1.0, %v620
    %v622 = vtanh.pop %v615
    %v624 = vrot.slane %v557, 6
    %v626 = vmul.f32 %v621, %v624
    %628 = vrot.lane.b32.xlu0 %v622, 64
    %v629 = vpop.permute.xlu0 %628
    %v631 = vmul.f32 %v621, %v629
    %633 = vrot.lane.b32.xlu0 %v631, 32
    %v634 = vpop.permute.xlu0 %633
    %v636 = vadd.f32 %v626, %v634
    %v637 = vtanh.pop %v636
    %639 = vrot.lane.b32.xlu0 %v637, 64
    %v640 = vpop.permute.xlu0 %639
    %v642 = vmul.f32 %v621, %v640
    %v643 = vpack.c.bf16 %v642, %v642
    %v645 = vrot.slane %v643, 3
    %646 = vrot.lane.b32.xlu0 %v645, 32
    %v647 = vpop.permute.xlu0 %646
    %v649 = vsel %vm152, %v647, 0
    %651 = vmatprep.subr.bf16.mxu0 0
    %652 = vmatpush1.bf16.msra.mxu0 0
    %653 = vmatprep.subr.bf16.mxu0 0
    %654 = vmatpush1.bf16.msra.mxu0 0
    %655 = vmatprep.subr.bf16.mxu0 0
    %656 = vmatpush1.bf16.msra.mxu0 0
    %657 = vmatprep.subr.bf16.mxu0 0
    %658 = vmatpush1.bf16.msra.mxu0 0
    %659 = vmatprep.subr.bf16.mxu0 0
    %660 = vmatpush1.bf16.msra.mxu0 0
    %661 = vmatprep.subr.bf16.mxu0 0
    %662 = vmatpush1.bf16.msra.mxu0 0
    %663 = vmatprep.subr.bf16.mxu0 0
    %664 = vmatpush1.bf16.msra.mxu0 %v336
    %665 = vmatprep.subr.bf16.mxu0 0
    %666 = vmatpush1.bf16.msra.mxu0 %v335
    %667 = vmatprep.subr.bf16.mxu0 0
    %668 = vmatpush2.bf16.msra.mxu0 0
    %669 = vmatprep.subr.bf16.mxu0 0
    %670 = vmatpush2.bf16.msra.mxu0 0
    %671 = vmatprep.subr.bf16.mxu0 0
    %672 = vmatpush2.bf16.msra.mxu0 0
    %673 = vmatprep.subr.bf16.mxu0 0
    %674 = vmatpush2.bf16.msra.mxu0 0
    %675 = vmatprep.subr.bf16.mxu0 0
    %676 = vmatpush2.bf16.msra.mxu0 0
    %677 = vmatprep.subr.bf16.mxu0 0
    %678 = vmatpush2.bf16.msra.mxu0 0
    %679 = vmatprep.subr.bf16.mxu0 0
    %680 = vmatpush2.bf16.msra.mxu0 0
    %681 = vmatprep.subr.bf16.mxu0 0
    %682 = vmatpush2.bf16.msra.mxu0 0
    %683 = vmatprep.mubr.bf16.mxu0 0
    %684 = vmatmul.mubr.bf16.gmra.mxu0 %v649
    %v685 = vpop.f32.mrf.mxu0
    %v686 = vadd.f32 0.0, %v685
    %v687 = vpop.f32.mrf.mxu0
    %v688 = vpop.f32.mrf.mxu0
    %v689 = vpop.f32.mrf.mxu0
    %690 = vdwg.mxu0
    %v691 = vadd.f32 %v231, %v686
    %v692 = vxor.u32 %v691, 2147483648
    %v693 = vmul.f32 %v692, 1.442695
    %v694 = vpow.pop %v693
    %v695 = vadd.f32 %v694, 1.0
    %v696 = vrcp.pop %v695
    %v697 = vmul.f32 1.0, %v696
    %v698 = vtanh.pop %v691
    %v700 = vrot.slane %v636, 6
    %v702 = vmul.f32 %v697, %v700
    %704 = vrot.lane.b32.xlu0 %v698, 64
    %v705 = vpop.permute.xlu0 %704
    %v707 = vmul.f32 %v697, %v705
    %709 = vrot.lane.b32.xlu0 %v707, 32
    %v710 = vpop.permute.xlu0 %709
    %v712 = vadd.f32 %v702, %v710
    %v713 = vtanh.pop %v712
    %715 = vrot.lane.b32.xlu0 %v713, 64
    %v716 = vpop.permute.xlu0 %715
    %v718 = vmul.f32 %v697, %v716
    %v719 = vpack.c.bf16 %v718, %v718
    %721 = vrot.lane.b32.xlu0 %v719, 32
    %v722 = vpop.permute.xlu0 %721
    %v724 = vsel %vm152, %v722, 0
    %726 = vmatprep.subr.bf16.mxu0 0
    %727 = vmatpush1.bf16.msra.mxu0 0
    %728 = vmatprep.subr.bf16.mxu0 0
    %729 = vmatpush1.bf16.msra.mxu0 0
    %730 = vmatprep.subr.bf16.mxu0 0
    %731 = vmatpush1.bf16.msra.mxu0 0
    %732 = vmatprep.subr.bf16.mxu0 0
    %733 = vmatpush1.bf16.msra.mxu0 0
    %734 = vmatprep.subr.bf16.mxu0 0
    %735 = vmatpush1.bf16.msra.mxu0 0
    %736 = vmatprep.subr.bf16.mxu0 0
    %737 = vmatpush1.bf16.msra.mxu0 0
    %738 = vmatprep.subr.bf16.mxu0 0
    %739 = vmatpush1.bf16.msra.mxu0 %v336
    %740 = vmatprep.subr.bf16.mxu0 0
    %741 = vmatpush1.bf16.msra.mxu0 %v335
    %742 = vmatprep.subr.bf16.mxu0 0
    %743 = vmatpush2.bf16.msra.mxu0 0
    %744 = vmatprep.subr.bf16.mxu0 0
    %745 = vmatpush2.bf16.msra.mxu0 0
    %746 = vmatprep.subr.bf16.mxu0 0
    %747 = vmatpush2.bf16.msra.mxu0 0
    %748 = vmatprep.subr.bf16.mxu0 0
    %749 = vmatpush2.bf16.msra.mxu0 0
    %750 = vmatprep.subr.bf16.mxu0 0
    %751 = vmatpush2.bf16.msra.mxu0 0
    %752 = vmatprep.subr.bf16.mxu0 0
    %753 = vmatpush2.bf16.msra.mxu0 0
    %754 = vmatprep.subr.bf16.mxu0 0
    %755 = vmatpush2.bf16.msra.mxu0 0
    %756 = vmatprep.subr.bf16.mxu0 0
    %757 = vmatpush2.bf16.msra.mxu0 0
    %758 = vmatprep.mubr.bf16.mxu0 0
    %759 = vmatmul.mubr.bf16.gmra.mxu0 %v724
    %v760 = vpop.f32.mrf.mxu0
    %v761 = vadd.f32 0.0, %v760
    %v762 = vpop.f32.mrf.mxu0
    %v763 = vpop.f32.mrf.mxu0
    %v764 = vpop.f32.mrf.mxu0
    %765 = vdwg.mxu0
    %v767 = vrot.slane %v761, 6
    %v769 = vadd.f32 %v231, %v767
    %v770 = vxor.u32 %v769, 2147483648
    %v771 = vmul.f32 %v770, 1.442695
    %v772 = vpow.pop %v771
    %v773 = vadd.f32 %v772, 1.0
    %v774 = vrcp.pop %v773
    %v775 = vmul.f32 1.0, %v774
    %v776 = vtanh.pop %v769
    %v778 = vrot.slane %v712, 6
    %v780 = vmul.f32 %v775, %v778
    %782 = vrot.lane.b32.xlu0 %v776, 64
    %v783 = vpop.permute.xlu0 %782
    %v785 = vmul.f32 %v775, %v783
    %787 = vrot.lane.b32.xlu0 %v785, 32
    %v788 = vpop.permute.xlu0 %787
    %v790 = vadd.f32 %v780, %v788
    %v791 = vtanh.pop %v790
    %793 = vrot.lane.b32.xlu0 %v791, 64
    %v794 = vpop.permute.xlu0 %793
    %v796 = vmul.f32 %v775, %v794
    %v797 = vpack.c.bf16 %v796, %v796
    %v799 = vrot.slane %v797, 1
    %800 = vrot.lane.b32.xlu0 %v799, 32
    %v801 = vpop.permute.xlu0 %800
    %v803 = vsel %vm152, %v801, 0
    %805 = vmatprep.subr.bf16.mxu0 0
    %806 = vmatpush1.bf16.msra.mxu0 0
    %807 = vmatprep.subr.bf16.mxu0 0
    %808 = vmatpush1.bf16.msra.mxu0 0
    %809 = vmatprep.subr.bf16.mxu0 0
    %810 = vmatpush1.bf16.msra.mxu0 0
    %811 = vmatprep.subr.bf16.mxu0 0
    %812 = vmatpush1.bf16.msra.mxu0 0
    %813 = vmatprep.subr.bf16.mxu0 0
    %814 = vmatpush1.bf16.msra.mxu0 0
    %815 = vmatprep.subr.bf16.mxu0 0
    %816 = vmatpush1.bf16.msra.mxu0 0
    %817 = vmatprep.subr.bf16.mxu0 0
    %818 = vmatpush1.bf16.msra.mxu0 %v336
    %819 = vmatprep.subr.bf16.mxu0 0
    %820 = vmatpush1.bf16.msra.mxu0 %v335
    %821 = vmatprep.subr.bf16.mxu0 0
    %822 = vmatpush2.bf16.msra.mxu0 0
    %823 = vmatprep.subr.bf16.mxu0 0
    %824 = vmatpush2.bf16.msra.mxu0 0
    %825 = vmatprep.subr.bf16.mxu0 0
    %826 = vmatpush2.bf16.msra.mxu0 0
    %827 = vmatprep.subr.bf16.mxu0 0
    %828 = vmatpush2.bf16.msra.mxu0 0
    %829 = vmatprep.subr.bf16.mxu0 0
    %830 = vmatpush2.bf16.msra.mxu0 0
    %831 = vmatprep.subr.bf16.mxu0 0
    %832 = vmatpush2.bf16.msra.mxu0 0
    %833 = vmatprep.subr.bf16.mxu0 0
    %834 = vmatpush2.bf16.msra.mxu0 0
    %835 = vmatprep.subr.bf16.mxu0 0
    %836 = vmatpush2.bf16.msra.mxu0 0
    %837 = vmatprep.mubr.bf16.mxu0 0
    %838 = vmatmul.mubr.bf16.gmra.mxu0 %v803
    %v839 = vpop.f32.mrf.mxu0
    %v840 = vadd.f32 0.0, %v839
    %v841 = vpop.f32.mrf.mxu0
    %v842 = vpop.f32.mrf.mxu0
    %v843 = vpop.f32.mrf.mxu0
    %844 = vdwg.mxu0
    %v846 = vrot.slane %v840, 4
    %v848 = vadd.f32 %v231, %v846
    %v849 = vxor.u32 %v848, 2147483648
    %v850 = vmul.f32 %v849, 1.442695
    %v851 = vpow.pop %v850
    %v852 = vadd.f32 %v851, 1.0
    %v853 = vrcp.pop %v852
    %v854 = vmul.f32 1.0, %v853
    %v855 = vtanh.pop %v848
    %v857 = vrot.slane %v790, 6
    %v859 = vmul.f32 %v854, %v857
    %861 = vrot.lane.b32.xlu0 %v855, 64
    %v862 = vpop.permute.xlu0 %861
    %v864 = vmul.f32 %v854, %v862
    %866 = vrot.lane.b32.xlu0 %v864, 32
    %v867 = vpop.permute.xlu0 %866
    %v869 = vadd.f32 %v859, %v867
    %v870 = vtanh.pop %v869
    %872 = vrot.lane.b32.xlu0 %v870, 64
    %v873 = vpop.permute.xlu0 %872
    %v875 = vmul.f32 %v854, %v873
    %v876 = vpack.c.bf16 %v875, %v875
    %v878 = vrot.slane %v876, 2
    %879 = vrot.lane.b32.xlu0 %v878, 32
    %v880 = vpop.permute.xlu0 %879
    %v882 = vsel %vm152, %v880, 0
    %884 = vmatprep.subr.bf16.mxu0 0
    %885 = vmatpush1.bf16.msra.mxu0 0
    %886 = vmatprep.subr.bf16.mxu0 0
    %887 = vmatpush1.bf16.msra.mxu0 0
    %888 = vmatprep.subr.bf16.mxu0 0
    %889 = vmatpush1.bf16.msra.mxu0 0
    %890 = vmatprep.subr.bf16.mxu0 0
    %891 = vmatpush1.bf16.msra.mxu0 0
    %892 = vmatprep.subr.bf16.mxu0 0
    %893 = vmatpush1.bf16.msra.mxu0 0
    %894 = vmatprep.subr.bf16.mxu0 0
    %895 = vmatpush1.bf16.msra.mxu0 0
    %896 = vmatprep.subr.bf16.mxu0 0
    %897 = vmatpush1.bf16.msra.mxu0 %v336
    %898 = vmatprep.subr.bf16.mxu0 0
    %899 = vmatpush1.bf16.msra.mxu0 %v335
    %900 = vmatprep.subr.bf16.mxu0 0
    %901 = vmatpush2.bf16.msra.mxu0 0
    %902 = vmatprep.subr.bf16.mxu0 0
    %903 = vmatpush2.bf16.msra.mxu0 0
    %904 = vmatprep.subr.bf16.mxu0 0
    %905 = vmatpush2.bf16.msra.mxu0 0
    %906 = vmatprep.subr.bf16.mxu0 0
    %907 = vmatpush2.bf16.msra.mxu0 0
    %908 = vmatprep.subr.bf16.mxu0 0
    %909 = vmatpush2.bf16.msra.mxu0 0
    %910 = vmatprep.subr.bf16.mxu0 0
    %911 = vmatpush2.bf16.msra.mxu0 0
    %912 = vmatprep.subr.bf16.mxu0 0
    %913 = vmatpush2.bf16.msra.mxu0 0
    %914 = vmatprep.subr.bf16.mxu0 0
    %915 = vmatpush2.bf16.msra.mxu0 0
    %916 = vmatprep.mubr.bf16.mxu0 0
    %917 = vmatmul.mubr.bf16.gmra.mxu0 %v882
    %v918 = vpop.f32.mrf.mxu0
    %v919 = vadd.f32 0.0, %v918
    %v920 = vpop.f32.mrf.mxu0
    %v921 = vpop.f32.mrf.mxu0
    %v922 = vpop.f32.mrf.mxu0
    %923 = vdwg.mxu0
    %v925 = vrot.slane %v919, 2
    %v927 = vadd.f32 %v231, %v925
    %v928 = vxor.u32 %v927, 2147483648
    %v929 = vmul.f32 %v928, 1.442695
    %v930 = vpow.pop %v929
    %v931 = vadd.f32 %v930, 1.0
    %v932 = vrcp.pop %v931
    %v933 = vmul.f32 1.0, %v932
    %v934 = vtanh.pop %v927
    %v936 = vrot.slane %v869, 6
    %v938 = vmul.f32 %v933, %v936
    %940 = vrot.lane.b32.xlu0 %v934, 64
    %v941 = vpop.permute.xlu0 %940
    %v943 = vmul.f32 %v933, %v941
    %945 = vrot.lane.b32.xlu0 %v943, 32
    %v946 = vpop.permute.xlu0 %945
    %v948 = vadd.f32 %v938, %v946
    %v949 = vtanh.pop %v948
    %951 = vrot.lane.b32.xlu0 %v949, 64
    %v952 = vpop.permute.xlu0 %951
    %v954 = vmul.f32 %v933, %v952
    %v955 = vpack.c.bf16 %v954, %v954
    %v957 = vrot.slane %v955, 3
    %958 = vrot.lane.b32.xlu0 %v957, 32
    %v959 = vpop.permute.xlu0 %958
    %v964 = vunpack.c.l.b16 %v135
    %v965 = vunpack.c.l.b16 %v136
    %v966 = vunpack.c.l.b16 %v137
    %v967 = vunpack.c.l.b16 %v138
    %v968 = vpack.c.b16 %v965, %v964
    %v969 = vpack.c.b16 %v967, %v966
    %v973 = vsel %vm152, %v959, 0
    %975 = vmatprep.subr.bf16.mxu0 0
    %976 = vmatpush1.bf16.msra.mxu0 0
    %977 = vmatprep.subr.bf16.mxu0 0
    %978 = vmatpush1.bf16.msra.mxu0 0
    %979 = vmatprep.subr.bf16.mxu0 0
    %980 = vmatpush1.bf16.msra.mxu0 0
    %981 = vmatprep.subr.bf16.mxu0 0
    %982 = vmatpush1.bf16.msra.mxu0 0
    %983 = vmatprep.subr.bf16.mxu0 0
    %984 = vmatpush1.bf16.msra.mxu0 0
    %985 = vmatprep.subr.bf16.mxu0 0
    %986 = vmatpush1.bf16.msra.mxu0 0
    %987 = vmatprep.subr.bf16.mxu0 0
    %988 = vmatpush1.bf16.msra.mxu0 %v969
    %989 = vmatprep.subr.bf16.mxu0 0
    %990 = vmatpush1.bf16.msra.mxu0 %v968
    %991 = vmatprep.subr.bf16.mxu0 0
    %992 = vmatpush2.bf16.msra.mxu0 0
    %993 = vmatprep.subr.bf16.mxu0 0
    %994 = vmatpush2.bf16.msra.mxu0 0
    %995 = vmatprep.subr.bf16.mxu0 0
    %996 = vmatpush2.bf16.msra.mxu0 0
    %997 = vmatprep.subr.bf16.mxu0 0
    %998 = vmatpush2.bf16.msra.mxu0 0
    %999 = vmatprep.subr.bf16.mxu0 0
    %1000 = vmatpush2.bf16.msra.mxu0 0
    %1001 = vmatprep.subr.bf16.mxu0 0
    %1002 = vmatpush2.bf16.msra.mxu0 0
    %1003 = vmatprep.subr.bf16.mxu0 0
    %1004 = vmatpush2.bf16.msra.mxu0 0
    %1005 = vmatprep.subr.bf16.mxu0 0
    %1006 = vmatpush2.bf16.msra.mxu0 0
    %1007 = vmatprep.mubr.bf16.mxu0 0
    %1008 = vmatmul.mubr.bf16.gmra.mxu0 %v973
    %v1009 = vpop.f32.mrf.mxu0
    %v1010 = vadd.f32 %v255, %v1009
    %v1011 = vpop.f32.mrf.mxu0
    %v1012 = vpop.f32.mrf.mxu0
    %v1013 = vpop.f32.mrf.mxu0
    %1014 = vdwg.mxu0
    %v1015 = vxor.u32 %v1010, 2147483648
    %v1016 = vmul.f32 %v1015, 1.442695
    %v1017 = vpow.pop %v1016
    %v1018 = vadd.f32 %v1017, 1.0
    %v1019 = vrcp.pop %v1018
    %v1020 = vmul.f32 1.0, %v1019
    %v1021 = vtanh.pop %v1010
    %v1023 = vrot.slane %v948, 6
    %v1025 = vmul.f32 %v1020, %v1023
    %1027 = vrot.lane.b32.xlu0 %v1021, 64
    %v1028 = vpop.permute.xlu0 %1027
    %v1030 = vmul.f32 %v1020, %v1028
    %1032 = vrot.lane.b32.xlu0 %v1030, 32
    %v1033 = vpop.permute.xlu0 %1032
    %v1035 = vadd.f32 %v1025, %v1033
    %v1036 = vtanh.pop %v1035
    %1038 = vrot.lane.b32.xlu0 %v1036, 64
    %v1039 = vpop.permute.xlu0 %1038
    %v1041 = vmul.f32 %v1020, %v1039
    %1043 = vrot.lane.b32.xlu0 %v1041, 32
    %v1044 = vpop.permute.xlu0 %1043
    %vm1046 = vcmask 254976
    %1047 = vst.msk [vmem:[#allocation2] sm:$0x3] %vm1046, %v1044
    %v1048 = vpack.c.bf16 %v1041, %v1041
    %1050 = vrot.lane.b32.xlu0 %v1048, 32
    %v1051 = vpop.permute.xlu0 %1050
    %v1053 = vsel %vm152, %v1051, 0
    %1055 = vmatprep.subr.bf16.mxu0 0
    %1056 = vmatpush1.bf16.msra.mxu0 0
    %1057 = vmatprep.subr.bf16.mxu0 0
    %1058 = vmatpush1.bf16.msra.mxu0 0
    %1059 = vmatprep.subr.bf16.mxu0 0
    %1060 = vmatpush1.bf16.msra.mxu0 0
    %1061 = vmatprep.subr.bf16.mxu0 0
    %1062 = vmatpush1.bf16.msra.mxu0 0
    %1063 = vmatprep.subr.bf16.mxu0 0
    %1064 = vmatpush1.bf16.msra.mxu0 0
    %1065 = vmatprep.subr.bf16.mxu0 0
    %1066 = vmatpush1.bf16.msra.mxu0 0
    %1067 = vmatprep.subr.bf16.mxu0 0
    %1068 = vmatpush1.bf16.msra.mxu0 %v969
    %1069 = vmatprep.subr.bf16.mxu0 0
    %1070 = vmatpush1.bf16.msra.mxu0 %v968
    %1071 = vmatprep.subr.bf16.mxu0 0
    %1072 = vmatpush2.bf16.msra.mxu0 0
    %1073 = vmatprep.subr.bf16.mxu0 0
    %1074 = vmatpush2.bf16.msra.mxu0 0
    %1075 = vmatprep.subr.bf16.mxu0 0
    %1076 = vmatpush2.bf16.msra.mxu0 0
    %1077 = vmatprep.subr.bf16.mxu0 0
    %1078 = vmatpush2.bf16.msra.mxu0 0
    %1079 = vmatprep.subr.bf16.mxu0 0
    %1080 = vmatpush2.bf16.msra.mxu0 0
    %1081 = vmatprep.subr.bf16.mxu0 0
    %1082 = vmatpush2.bf16.msra.mxu0 0
    %1083 = vmatprep.subr.bf16.mxu0 0
    %1084 = vmatpush2.bf16.msra.mxu0 0
    %1085 = vmatprep.subr.bf16.mxu0 0
    %1086 = vmatpush2.bf16.msra.mxu0 0
    %1087 = vmatprep.mubr.bf16.mxu0 0
    %1088 = vmatmul.mubr.bf16.gmra.mxu0 %v1053
    %v1089 = vpop.f32.mrf.mxu0
    %v1090 = vadd.f32 0.0, %v1089
    %v1091 = vpop.f32.mrf.mxu0
    %v1092 = vpop.f32.mrf.mxu0
    %v1093 = vpop.f32.mrf.mxu0
    %1094 = vdwg.mxu0
    %v1095 = vadd.f32 %v324, %v1090
    %v1096 = vxor.u32 %v1095, 2147483648
    %v1097 = vmul.f32 %v1096, 1.442695
    %v1098 = vpow.pop %v1097
    %v1099 = vadd.f32 %v1098, 1.0
    %v1100 = vrcp.pop %v1099
    %v1101 = vmul.f32 1.0, %v1100
    %v1102 = vtanh.pop %v1095
    %v1103 = vmul.f32 %v1101, %v1035
    %1105 = vrot.lane.b32.xlu0 %v1102, 64
    %v1106 = vpop.permute.xlu0 %1105
    %v1108 = vmul.f32 %v1101, %v1106
    %1110 = vrot.lane.b32.xlu0 %v1108, 32
    %v1111 = vpop.permute.xlu0 %1110
    %v1113 = vadd.f32 %v1103, %v1111
    %v1114 = vtanh.pop %v1113
    %1116 = vrot.lane.b32.xlu0 %v1114, 64
    %v1117 = vpop.permute.xlu0 %1116
    %v1119 = vmul.f32 %v1101, %v1117
    %1121 = vrot.lane.b32.xlu0 %v1119, 32
    %v1122 = vpop.permute.xlu0 %1121
    %1124 = vst.msk [vmem:[#allocation2 + $0x2] sm:$0x3] %vm1046, %v1122
    %v1125 = vpack.c.bf16 %v1119, %v1119
    %1127 = vrot.lane.b32.xlu0 %v1125, 32
    %v1128 = vpop.permute.xlu0 %1127
    %v1130 = vsel %vm152, %v1128, 0
    %1132 = vmatprep.subr.bf16.mxu0 0
    %1133 = vmatpush1.bf16.msra.mxu0 0
    %1134 = vmatprep.subr.bf16.mxu0 0
    %1135 = vmatpush1.bf16.msra.mxu0 0
    %1136 = vmatprep.subr.bf16.mxu0 0
    %1137 = vmatpush1.bf16.msra.mxu0 0
    %1138 = vmatprep.subr.bf16.mxu0 0
    %1139 = vmatpush1.bf16.msra.mxu0 0
    %1140 = vmatprep.subr.bf16.mxu0 0
    %1141 = vmatpush1.bf16.msra.mxu0 0
    %1142 = vmatprep.subr.bf16.mxu0 0
    %1143 = vmatpush1.bf16.msra.mxu0 0
    %1144 = vmatprep.subr.bf16.mxu0 0
    %1145 = vmatpush1.bf16.msra.mxu0 %v969
    %1146 = vmatprep.subr.bf16.mxu0 0
    %1147 = vmatpush1.bf16.msra.mxu0 %v968
    %1148 = vmatprep.subr.bf16.mxu0 0
    %1149 = vmatpush2.bf16.msra.mxu0 0
    %1150 = vmatprep.subr.bf16.mxu0 0
    %1151 = vmatpush2.bf16.msra.mxu0 0
    %1152 = vmatprep.subr.bf16.mxu0 0
    %1153 = vmatpush2.bf16.msra.mxu0 0
    %1154 = vmatprep.subr.bf16.mxu0 0
    %1155 = vmatpush2.bf16.msra.mxu0 0
    %1156 = vmatprep.subr.bf16.mxu0 0
    %1157 = vmatpush2.bf16.msra.mxu0 0
    %1158 = vmatprep.subr.bf16.mxu0 0
    %1159 = vmatpush2.bf16.msra.mxu0 0
    %1160 = vmatprep.subr.bf16.mxu0 0
    %1161 = vmatpush2.bf16.msra.mxu0 0
    %1162 = vmatprep.subr.bf16.mxu0 0
    %1163 = vmatpush2.bf16.msra.mxu0 0
    %1164 = vmatprep.mubr.bf16.mxu0 0
    %1165 = vmatmul.mubr.bf16.gmra.mxu0 %v1130
    %v1166 = vpop.f32.mrf.mxu0
    %v1167 = vadd.f32 0.0, %v1166
    %v1168 = vpop.f32.mrf.mxu0
    %v1169 = vpop.f32.mrf.mxu0
    %v1170 = vpop.f32.mrf.mxu0
    %1171 = vdwg.mxu0
    %v1172 = vadd.f32 %v324, %v1167
    %v1173 = vxor.u32 %v1172, 2147483648
    %v1174 = vmul.f32 %v1173, 1.442695
    %v1175 = vpow.pop %v1174
    %v1176 = vadd.f32 %v1175, 1.0
    %v1177 = vrcp.pop %v1176
    %v1178 = vmul.f32 1.0, %v1177
    %v1179 = vtanh.pop %v1172
    %v1180 = vmul.f32 %v1178, %v1113
    %1182 = vrot.lane.b32.xlu0 %v1179, 64
    %v1183 = vpop.permute.xlu0 %1182
    %v1185 = vmul.f32 %v1178, %v1183
    %1187 = vrot.lane.b32.xlu0 %v1185, 32
    %v1188 = vpop.permute.xlu0 %1187
    %v1190 = vadd.f32 %v1180, %v1188
    %v1191 = vtanh.pop %v1190
    %1193 = vrot.lane.b32.xlu0 %v1191, 64
    %v1194 = vpop.permute.xlu0 %1193
    %v1196 = vmul.f32 %v1178, %v1194
    %v1197 = vpack.c.bf16 %v1196, %v1196
    %1199 = vrot.lane.b32.xlu0 %v1197, 32
    %v1200 = vpop.permute.xlu0 %1199
    %v1202 = vsel %vm152, %v1200, 0
    %1204 = vmatprep.subr.bf16.mxu0 0
    %1205 = vmatpush1.bf16.msra.mxu0 0
    %1206 = vmatprep.subr.bf16.mxu0 0
    %1207 = vmatpush1.bf16.msra.mxu0 0
    %1208 = vmatprep.subr.bf16.mxu0 0
    %1209 = vmatpush1.bf16.msra.mxu0 0
    %1210 = vmatprep.subr.bf16.mxu0 0
    %1211 = vmatpush1.bf16.msra.mxu0 0
    %1212 = vmatprep.subr.bf16.mxu0 0
    %1213 = vmatpush1.bf16.msra.mxu0 0
    %1214 = vmatprep.subr.bf16.mxu0 0
    %1215 = vmatpush1.bf16.msra.mxu0 0
    %1216 = vmatprep.subr.bf16.mxu0 0
    %1217 = vmatpush1.bf16.msra.mxu0 %v969
    %1218 = vmatprep.subr.bf16.mxu0 0
    %1219 = vmatpush1.bf16.msra.mxu0 %v968
    %1220 = vmatprep.subr.bf16.mxu0 0
    %1221 = vmatpush2.bf16.msra.mxu0 0
    %1222 = vmatprep.subr.bf16.mxu0 0
    %1223 = vmatpush2.bf16.msra.mxu0 0
    %1224 = vmatprep.subr.bf16.mxu0 0
    %1225 = vmatpush2.bf16.msra.mxu0 0
    %1226 = vmatprep.subr.bf16.mxu0 0
    %1227 = vmatpush2.bf16.msra.mxu0 0
    %1228 = vmatprep.subr.bf16.mxu0 0
    %1229 = vmatpush2.bf16.msra.mxu0 0
    %1230 = vmatprep.subr.bf16.mxu0 0
    %1231 = vmatpush2.bf16.msra.mxu0 0
    %1232 = vmatprep.subr.bf16.mxu0 0
    %1233 = vmatpush2.bf16.msra.mxu0 0
    %1234 = vmatprep.subr.bf16.mxu0 0
    %1235 = vmatpush2.bf16.msra.mxu0 0
    %1236 = vmatprep.mubr.bf16.mxu0 0
    %1237 = vmatmul.mubr.bf16.gmra.mxu0 %v1202
    %v1238 = vpop.f32.mrf.mxu0
    %v1239 = vadd.f32 0.0, %v1238
    %v1240 = vpop.f32.mrf.mxu0
    %v1241 = vpop.f32.mrf.mxu0
    %v1242 = vpop.f32.mrf.mxu0
    %1243 = vdwg.mxu0
    %v1245 = vrot.slane %v1239, 6
    %v1247 = vadd.f32 %v324, %v1245
    %v1248 = vxor.u32 %v1247, 2147483648
    %v1249 = vmul.f32 %v1248, 1.442695
    %v1250 = vpow.pop %v1249
    %v1251 = vadd.f32 %v1250, 1.0
    %v1252 = vrcp.pop %v1251
    %v1253 = vmul.f32 1.0, %v1252
    %v1254 = vtanh.pop %v1247
    %v1256 = vrot.slane %v1190, 6
    %v1258 = vmul.f32 %v1253, %v1256
    %1260 = vrot.lane.b32.xlu0 %v1254, 64
    %v1261 = vpop.permute.xlu0 %1260
    %v1263 = vmul.f32 %v1253, %v1261
    %1265 = vrot.lane.b32.xlu0 %v1263, 32
    %v1266 = vpop.permute.xlu0 %1265
    %v1268 = vadd.f32 %v1258, %v1266
    %v1269 = vtanh.pop %v1268
    %1271 = vrot.lane.b32.xlu0 %v1269, 64
    %v1272 = vpop.permute.xlu0 %1271
    %v1274 = vmul.f32 %v1253, %v1272
    %1276 = vrot.lane.b32.xlu0 %v1274, 32
    %v1277 = vpop.permute.xlu0 %1276
    %vm1279 = vcmask 257026
    %1280 = vst.msk [vmem:[#allocation2 + $0x2] sm:$0xc] %vm1279, %v1277
    %v1281 = vpack.c.bf16 %v1274, %v1274
    %v1283 = vrot.slane %v1281, 1
    %1284 = vrot.lane.b32.xlu0 %v1283, 32
    %v1285 = vpop.permute.xlu0 %1284
    %v1287 = vsel %vm152, %v1285, 0
    %1289 = vmatprep.subr.bf16.mxu0 0
    %1290 = vmatpush1.bf16.msra.mxu0 0
    %1291 = vmatprep.subr.bf16.mxu0 0
    %1292 = vmatpush1.bf16.msra.mxu0 0
    %1293 = vmatprep.subr.bf16.mxu0 0
    %1294 = vmatpush1.bf16.msra.mxu0 0
    %1295 = vmatprep.subr.bf16.mxu0 0
    %1296 = vmatpush1.bf16.msra.mxu0 0
    %1297 = vmatprep.subr.bf16.mxu0 0
    %1298 = vmatpush1.bf16.msra.mxu0 0
    %1299 = vmatprep.subr.bf16.mxu0 0
    %1300 = vmatpush1.bf16.msra.mxu0 0
    %1301 = vmatprep.subr.bf16.mxu0 0
    %1302 = vmatpush1.bf16.msra.mxu0 %v969
    %1303 = vmatprep.subr.bf16.mxu0 0
    %1304 = vmatpush1.bf16.msra.mxu0 %v968
    %1305 = vmatprep.subr.bf16.mxu0 0
    %1306 = vmatpush2.bf16.msra.mxu0 0
    %1307 = vmatprep.subr.bf16.mxu0 0
    %1308 = vmatpush2.bf16.msra.mxu0 0
    %1309 = vmatprep.subr.bf16.mxu0 0
    %1310 = vmatpush2.bf16.msra.mxu0 0
    %1311 = vmatprep.subr.bf16.mxu0 0
    %1312 = vmatpush2.bf16.msra.mxu0 0
    %1313 = vmatprep.subr.bf16.mxu0 0
    %1314 = vmatpush2.bf16.msra.mxu0 0
    %1315 = vmatprep.subr.bf16.mxu0 0
    %1316 = vmatpush2.bf16.msra.mxu0 0
    %1317 = vmatprep.subr.bf16.mxu0 0
    %1318 = vmatpush2.bf16.msra.mxu0 0
    %1319 = vmatprep.subr.bf16.mxu0 0
    %1320 = vmatpush2.bf16.msra.mxu0 0
    %1321 = vmatprep.mubr.bf16.mxu0 0
    %1322 = vmatmul.mubr.bf16.gmra.mxu0 %v1287
    %v1323 = vpop.f32.mrf.mxu0
    %v1324 = vadd.f32 0.0, %v1323
    %v1325 = vpop.f32.mrf.mxu0
    %v1326 = vpop.f32.mrf.mxu0
    %v1327 = vpop.f32.mrf.mxu0
    %1328 = vdwg.mxu0
    %v1329 = vadd.f32 %v324, %v1324
    %v1330 = vxor.u32 %v1329, 2147483648
    %v1331 = vmul.f32 %v1330, 1.442695
    %v1332 = vpow.pop %v1331
    %v1333 = vadd.f32 %v1332, 1.0
    %v1334 = vrcp.pop %v1333
    %v1335 = vmul.f32 1.0, %v1334
    %v1336 = vtanh.pop %v1329
    %v1338 = vrot.slane %v1268, 2
    %v1340 = vmul.f32 %v1335, %v1338
    %1342 = vrot.lane.b32.xlu0 %v1336, 64
    %v1343 = vpop.permute.xlu0 %1342
    %v1345 = vmul.f32 %v1335, %v1343
    %1347 = vrot.lane.b32.xlu0 %v1345, 32
    %v1348 = vpop.permute.xlu0 %1347
    %v1350 = vadd.f32 %v1340, %v1348
    %v1351 = vtanh.pop %v1350
    %1353 = vrot.lane.b32.xlu0 %v1351, 64
    %v1354 = vpop.permute.xlu0 %1353
    %v1356 = vmul.f32 %v1335, %v1354
    %v1357 = vpack.c.bf16 %v1356, %v1356
    %1359 = vrot.lane.b32.xlu0 %v1357, 32
    %v1360 = vpop.permute.xlu0 %1359
    %v1362 = vsel %vm152, %v1360, 0
    %1364 = vmatprep.subr.bf16.mxu0 0
    %1365 = vmatpush1.bf16.msra.mxu0 0
    %1366 = vmatprep.subr.bf16.mxu0 0
    %1367 = vmatpush1.bf16.msra.mxu0 0
    %1368 = vmatprep.subr.bf16.mxu0 0
    %1369 = vmatpush1.bf16.msra.mxu0 0
    %1370 = vmatprep.subr.bf16.mxu0 0
    %1371 = vmatpush1.bf16.msra.mxu0 0
    %1372 = vmatprep.subr.bf16.mxu0 0
    %1373 = vmatpush1.bf16.msra.mxu0 0
    %1374 = vmatprep.subr.bf16.mxu0 0
    %1375 = vmatpush1.bf16.msra.mxu0 0
    %1376 = vmatprep.subr.bf16.mxu0 0
    %1377 = vmatpush1.bf16.msra.mxu0 %v969
    %1378 = vmatprep.subr.bf16.mxu0 0
    %1379 = vmatpush1.bf16.msra.mxu0 %v968
    %1380 = vmatprep.subr.bf16.mxu0 0
    %1381 = vmatpush2.bf16.msra.mxu0 0
    %1382 = vmatprep.subr.bf16.mxu0 0
    %1383 = vmatpush2.bf16.msra.mxu0 0
    %1384 = vmatprep.subr.bf16.mxu0 0
    %1385 = vmatpush2.bf16.msra.mxu0 0
    %1386 = vmatprep.subr.bf16.mxu0 0
    %1387 = vmatpush2.bf16.msra.mxu0 0
    %1388 = vmatprep.subr.bf16.mxu0 0
    %1389 = vmatpush2.bf16.msra.mxu0 0
    %1390 = vmatprep.subr.bf16.mxu0 0
    %1391 = vmatpush2.bf16.msra.mxu0 0
    %1392 = vmatprep.subr.bf16.mxu0 0
    %1393 = vmatpush2.bf16.msra.mxu0 0
    %1394 = vmatprep.subr.bf16.mxu0 0
    %1395 = vmatpush2.bf16.msra.mxu0 0
    %1396 = vmatprep.mubr.bf16.mxu0 0
    %1397 = vmatmul.mubr.bf16.gmra.mxu0 %v1362
    %v1398 = vpop.f32.mrf.mxu0
    %v1399 = vadd.f32 0.0, %v1398
    %v1400 = vpop.f32.mrf.mxu0
    %v1401 = vpop.f32.mrf.mxu0
    %v1402 = vpop.f32.mrf.mxu0
    %1403 = vdwg.mxu0
    %v1405 = vrot.slane %v1399, 6
    %v1407 = vadd.f32 %v324, %v1405
    %v1408 = vxor.u32 %v1407, 2147483648
    %v1409 = vmul.f32 %v1408, 1.442695
    %v1410 = vpow.pop %v1409
    %v1411 = vadd.f32 %v1410, 1.0
    %v1412 = vrcp.pop %v1411
    %v1413 = vmul.f32 1.0, %v1412
    %v1414 = vtanh.pop %v1407
    %v1416 = vrot.slane %v1350, 6
    %v1418 = vmul.f32 %v1413, %v1416
    %1420 = vrot.lane.b32.xlu0 %v1414, 64
    %v1421 = vpop.permute.xlu0 %1420
    %v1423 = vmul.f32 %v1413, %v1421
    %1425 = vrot.lane.b32.xlu0 %v1423, 32
    %v1426 = vpop.permute.xlu0 %1425
    %v1428 = vadd.f32 %v1418, %v1426
    %v1429 = vtanh.pop %v1428
    %1431 = vrot.lane.b32.xlu0 %v1429, 64
    %v1432 = vpop.permute.xlu0 %1431
    %v1434 = vmul.f32 %v1413, %v1432
    %v1435 = vpack.c.bf16 %v1434, %v1434
    %v1437 = vrot.slane %v1435, 1
    %1438 = vrot.lane.b32.xlu0 %v1437, 32
    %v1439 = vpop.permute.xlu0 %1438
    %v1441 = vsel %vm152, %v1439, 0
    %1443 = vmatprep.subr.bf16.mxu0 0
    %1444 = vmatpush1.bf16.msra.mxu0 0
    %1445 = vmatprep.subr.bf16.mxu0 0
    %1446 = vmatpush1.bf16.msra.mxu0 0
    %1447 = vmatprep.subr.bf16.mxu0 0
    %1448 = vmatpush1.bf16.msra.mxu0 0
    %1449 = vmatprep.subr.bf16.mxu0 0
    %1450 = vmatpush1.bf16.msra.mxu0 0
    %1451 = vmatprep.subr.bf16.mxu0 0
    %1452 = vmatpush1.bf16.msra.mxu0 0
    %1453 = vmatprep.subr.bf16.mxu0 0
    %1454 = vmatpush1.bf16.msra.mxu0 0
    %1455 = vmatprep.subr.bf16.mxu0 0
    %1456 = vmatpush1.bf16.msra.mxu0 %v969
    %1457 = vmatprep.subr.bf16.mxu0 0
    %1458 = vmatpush1.bf16.msra.mxu0 %v968
    %1459 = vmatprep.subr.bf16.mxu0 0
    %1460 = vmatpush2.bf16.msra.mxu0 0
    %1461 = vmatprep.subr.bf16.mxu0 0
    %1462 = vmatpush2.bf16.msra.mxu0 0
    %1463 = vmatprep.subr.bf16.mxu0 0
    %1464 = vmatpush2.bf16.msra.mxu0 0
    %1465 = vmatprep.subr.bf16.mxu0 0
    %1466 = vmatpush2.bf16.msra.mxu0 0
    %1467 = vmatprep.subr.bf16.mxu0 0
    %1468 = vmatpush2.bf16.msra.mxu0 0
    %1469 = vmatprep.subr.bf16.mxu0 0
    %1470 = vmatpush2.bf16.msra.mxu0 0
    %1471 = vmatprep.subr.bf16.mxu0 0
    %1472 = vmatpush2.bf16.msra.mxu0 0
    %1473 = vmatprep.subr.bf16.mxu0 0
    %1474 = vmatpush2.bf16.msra.mxu0 0
    %1475 = vmatprep.mubr.bf16.mxu0 0
    %1476 = vmatmul.mubr.bf16.gmra.mxu0 %v1441
    %v1477 = vpop.f32.mrf.mxu0
    %v1478 = vadd.f32 0.0, %v1477
    %v1479 = vpop.f32.mrf.mxu0
    %v1480 = vpop.f32.mrf.mxu0
    %v1481 = vpop.f32.mrf.mxu0
    %1482 = vdwg.mxu0
    %v1484 = vrot.slane %v1478, 4
    %v1486 = vadd.f32 %v324, %v1484
    %v1487 = vxor.u32 %v1486, 2147483648
    %v1488 = vmul.f32 %v1487, 1.442695
    %v1489 = vpow.pop %v1488
    %v1490 = vadd.f32 %v1489, 1.0
    %v1491 = vrcp.pop %v1490
    %v1492 = vmul.f32 1.0, %v1491
    %v1493 = vtanh.pop %v1486
    %v1495 = vrot.slane %v1428, 6
    %v1497 = vmul.f32 %v1492, %v1495
    %1499 = vrot.lane.b32.xlu0 %v1493, 64
    %v1500 = vpop.permute.xlu0 %1499
    %v1502 = vmul.f32 %v1492, %v1500
    %1504 = vrot.lane.b32.xlu0 %v1502, 32
    %v1505 = vpop.permute.xlu0 %1504
    %v1507 = vadd.f32 %v1497, %v1505
    %v1508 = vtanh.pop %v1507
    %1510 = vrot.lane.b32.xlu0 %v1508, 64
    %v1511 = vpop.permute.xlu0 %1510
    %v1513 = vmul.f32 %v1492, %v1511
    %1515 = vrot.lane.b32.xlu0 %v1513, 32
    %v1516 = vpop.permute.xlu0 %1515
    %vm1518 = vcmask 259076
    %1519 = vst.msk [vmem:[#allocation2 + $0x2] sm:$0x30] %vm1518, %v1516
    %v1520 = vld [vmem:[#allocation2] sm:$0xff]
    %v1521 = vld [vmem:[#allocation14] sm:$0xff]
    %v1522 = vld [vmem:[#allocation14 + $0x8] sm:$0xff]
    %v1523 = vld [vmem:[#allocation14 + $0x10] sm:$0xff]
    %v1524 = vld [vmem:[#allocation14 + $0x18] sm:$0xff]
    %v1525 = vld [vmem:[%s9] sm:$0x1]
    %v1527 = vlaneseq
    %v1528 = vshrl.u32 %v1527, 7
    %v1529 = vsub.s32 0, %v1528
    %v1530 = vrot.slane %v1525, %v1529
    %v1533 = vsel %vm152, %v1520, 0
    %1535 = vmatprep.subr.mxu0 0.0
    %1536 = vmatpush1.msra.mxu0 0.0
    %1537 = vmatprep.subr.mxu0 0.0
    %1538 = vmatpush1.msra.mxu0 0.0
    %1539 = vmatprep.subr.mxu0 0.0
    %1540 = vmatpush1.msra.mxu0 0.0
    %1541 = vmatprep.subr.mxu0 0.0
    %1542 = vmatpush1.msra.mxu0 0.0
    %1543 = vmatprep.subr.mxu0 0.0
    %1544 = vmatpush1.msra.mxu0 0.0
    %1545 = vmatprep.subr.mxu0 0.0
    %1546 = vmatpush1.msra.mxu0 0.0
    %1547 = vmatprep.subr.mxu0 0.0
    %1548 = vmatpush1.msra.mxu0 0.0
    %1549 = vmatprep.subr.mxu0 0.0
    %1550 = vmatpush1.msra.mxu0 0.0
    %1551 = vmatprep.subr.mxu0 0.0
    %1552 = vmatpush1.msra.mxu0 0.0
    %1553 = vmatprep.subr.mxu0 0.0
    %1554 = vmatpush1.msra.mxu0 0.0
    %1555 = vmatprep.subr.mxu0 0.0
    %1556 = vmatpush1.msra.mxu0 0.0
    %1557 = vmatprep.subr.mxu0 0.0
    %1558 = vmatpush1.msra.mxu0 0.0
    %1559 = vmatprep.subr.mxu0 0.0
    %1560 = vmatpush1.msra.mxu0 %v1524
    %1561 = vmatprep.subr.mxu0 0.0
    %1562 = vmatpush1.msra.mxu0 %v1523
    %1563 = vmatprep.subr.mxu0 0.0
    %1564 = vmatpush1.msra.mxu0 %v1522
    %1565 = vmatprep.subr.mxu0 0.0
    %1566 = vmatpush1.msra.mxu0 %v1521
    %1567 = vmatprep.subr.mxu0 0.0
    %1568 = vmatpush2.msra.mxu0 0.0
    %1569 = vmatprep.subr.mxu0 0.0
    %1570 = vmatpush2.msra.mxu0 0.0
    %1571 = vmatprep.subr.mxu0 0.0
    %1572 = vmatpush2.msra.mxu0 0.0
    %1573 = vmatprep.subr.mxu0 0.0
    %1574 = vmatpush2.msra.mxu0 0.0
    %1575 = vmatprep.subr.mxu0 0.0
    %1576 = vmatpush2.msra.mxu0 0.0
    %1577 = vmatprep.subr.mxu0 0.0
    %1578 = vmatpush2.msra.mxu0 0.0
    %1579 = vmatprep.subr.mxu0 0.0
    %1580 = vmatpush2.msra.mxu0 0.0
    %1581 = vmatprep.subr.mxu0 0.0
    %1582 = vmatpush2.msra.mxu0 0.0
    %1583 = vmatprep.subr.mxu0 0.0
    %1584 = vmatpush2.msra.mxu0 0.0
    %1585 = vmatprep.subr.mxu0 0.0
    %1586 = vmatpush2.msra.mxu0 0.0
    %1587 = vmatprep.subr.mxu0 0.0
    %1588 = vmatpush2.msra.mxu0 0.0
    %1589 = vmatprep.subr.mxu0 0.0
    %1590 = vmatpush2.msra.mxu0 0.0
    %1591 = vmatprep.subr.mxu0 0.0
    %1592 = vmatpush2.msra.mxu0 0.0
    %1593 = vmatprep.subr.mxu0 0.0
    %1594 = vmatpush2.msra.mxu0 0.0
    %1595 = vmatprep.subr.mxu0 0.0
    %1596 = vmatpush2.msra.mxu0 0.0
    %1597 = vmatprep.subr.mxu0 0.0
    %1598 = vmatpush2.msra.mxu0 0.0
    %1599 = vmatprep.mubr.f32.mxu0 0.0
    %1600 = vmatmul.mubr.f32.gmra.mxu0 %v1533
    %v1601 = vpop.f32.mrf.mxu0
    %v1602 = vadd.f32 %v1530, %v1601
    %v1603 = vpop.f32.mrf.mxu0
    %1604 = vdwg.mxu0
    %1605 = vst [vmem:[#allocation15] sm:$0xff] %v1602
    // Predicated region
    $region70: #{tpu_custom_call.1} parent=1 // pred_check
      _
    $region71: #{tpu_custom_call.1} parent=1 // pred_check_branch
      %1607 = sbr.rel (0) target = $region73
    $region72: #{tpu_custom_call.1} parent=1 // pred_region
      %s1609 = ssub.s32 128, 128
      %1610 = vsyncadd [#allocation5], %s1609
      %s1612 = sshll.u32 [#allocation15], 4
      %s1613 = int_to_ptr.vmem [resolvable:$true] %s1612
      %1615 = dma.vmem_to_hbm [thread:$0]  %s1613, 128, %s10, [#allocation5]
    $region73: #{tpu_custom_call.1} parent=1 // pred_fallthru
      _
    // Predicated region
    $region74: #{tpu_custom_call.1} parent=1 // pred_check
      _
    $region75: #{tpu_custom_call.1} parent=1 // pred_check_branch
      %1617 = sbr.rel (0) target = $region77
    $region76: #{tpu_custom_call.1} parent=1 // pred_region
      %1618 = dma.done [#allocation5], 128
    $region77: #{tpu_custom_call.1} parent=1 // pred_fallthru
      _
    %1619 = vsyncpa [#allocation4], 1
    %1620 = vsyncpa [#allocation7], 1
    %1621 = vsyncpa [#allocation10], 1
    %1622 = vsyncpa [#allocation13], 1
    %1623 = vsyncpa [#allocation5], 1

</llo_original>
